<compile_context>
chip_gen: v6e
topology: v6e:2x2x1
jax: 0.10.0
libtpu: 0.0.40
codegen_flags: <defaults>
</compile_context>

<pallas_src>
import jax
import jax.numpy as jnp
from jax.experimental import pallas as pl
from jax.experimental.pallas import tpu as pltpu

EPS = 1e-5


# --------------------------------------------------------------------------------------
# Pass 1: per-quadrant folded conv + bias, streaming per-tile channel sum / sum-of-squares
# --------------------------------------------------------------------------------------
def _conv_stats_kernel(xp_ref, wq_ref, b_ref, y_ref, stats_ref):
    # xp_ref:    (H+2, W+2, Cin)      bf16, zero-padded ORIGINAL-resolution image (batch n)
    # wq_ref:    (4, 4*Cin, Cout_p)   bf16, per-quadrant tap-folded weights
    # b_ref:     (1, Cout_p)          f32 conv bias
    # y_ref:     (4, TRh*W, Cout_p)   f32 conv+bias output for this row tile (4 quadrants)
    # stats_ref: (2, Cout_p)          f32 per-tile [sum; sum of squares]
    t = pl.program_id(1)
    _, wpad, cin = xp_ref.shape
    wd = wpad - 2                       # original width W
    _, mq, cout_p = y_ref.shape
    trh = mq // wd                      # quadrant rows per tile (= block_rows // 2)

    r0 = t * trh
    if trh % 8 == 0:
        r0 = pl.multiple_of(r0, 8)
    slab = xp_ref[pl.ds(r0, trh + 2)]   # (trh+2, W+2, Cin) bf16 -- all rows this tile needs

    bias = b_ref[...]                   # (1, Cout_p) f32, read/broadcast once
    s1 = jnp.zeros((1, cout_p), jnp.float32)
    s2 = jnp.zeros((1, cout_p), jnp.float32)

    for pr in (0, 1):                   # output row parity
        for pc in (0, 1):               # output col parity
            # 2x2 distinct source offsets per quadrant -> K = 4*Cin contraction
            pieces = [
                slab[pr + a:pr + a + trh, pc + b:pc + b + wd, :].reshape(mq, cin)
                for a in (0, 1) for b in (0, 1)
            ]
            patch = jnp.concatenate(pieces, axis=-1)            # (mq, 4*Cin) bf16
            acc = jnp.dot(patch, wq_ref[2 * pr + pc],
                          preferred_element_type=jnp.float32) + bias
            y_ref[2 * pr + pc] = acc                            # lane-dense (mq, 128k) store
            s1 = s1 + jnp.sum(acc, axis=0, keepdims=True)
            s2 = s2 + jnp.sum(acc * acc, axis=0, keepdims=True)

    stats_ref[0:1, :] = s1
    stats_ref[1:2, :] = s2


# --------------------------------------------------------------------------------------
# Pass 2: y * scale + shift, ReLU   (scale/shift already fold mean/var/gamma/beta)
# --------------------------------------------------------------------------------------
def _bn_relu_kernel(y_ref, scale_ref, shift_ref, o_ref):
    o_ref[...] = jnp.maximum(y_ref[...] * scale_ref[...] + shift_ref[...], 0.0)


def unet_up_conv_block(x_nchw, w_oihw, bias, gamma, beta, *, block_rows=None):
    """Forward pass of UnetUpConvBlock.  x_nchw: (N, Cin, H, W) -> (N, Cout, 2H, 2W)."""
    N, Cin, H, W = x_nchw.shape
    Cout = w_oihw.shape[0]
    assert w_oihw.shape == (Cout, Cin, 3, 3)
    Hp, Wp = 2 * H, 2 * W
    Cout_p = ((Cout + 127) // 128) * 128

    # ---- row tile (in upsampled rows): even, divides Hp, output tile <= ~2 MiB ----
    if block_rows is None:
        target = 2 * 1024 * 1024
        block_rows = 2
        for tr in range(2, Hp + 1, 2):
            if Hp % tr == 0 and 16 * (tr // 2) * W * Cout_p <= target:
                block_rows = tr
    assert block_rows % 2 == 0 and Hp % block_rows == 0
    TRh = block_rows // 2               # quadrant rows per tile
    n_tiles = Hp // block_rows
    MQ = TRh * W

    # ---- input prep: NHWC, zero pad spatial by 1, bf16 (upsample fused in-kernel) ----
    xp = jnp.pad(jnp.transpose(x_nchw, (0, 2, 3, 1)).astype(jnp.bfloat16),
                 ((0, 0), (1, 1), (1, 1), (0, 0)))               # (N, H+2, W+2, Cin)

    # ---- fold 3x3 taps per parity quadrant into a (4*Cin, Cout_p) matrix ----
    w_hwio = jnp.transpose(w_oihw, (2, 3, 1, 0)).astype(jnp.float32)   # (3,3,Cin,Cout)
    groups = {0: ((0, 1), (1, 3)), 1: ((0, 2), (2, 3))}
    quads = []
    for pr in (0, 1):
        for pc in (0, 1):
            parts = []
            for a in (0, 1):
                rs, re = groups[pr][a]
                wa = jnp.sum(w_hwio[rs:re], axis=0)              # (3, Cin, Cout)
                for bb in (0, 1):
                    cs, ce = groups[pc][bb]
                    parts.append(jnp.sum(wa[cs:ce], axis=0))     # (Cin, Cout)
            quads.append(jnp.concatenate(parts, axis=0))         # (4*Cin, Cout)
    wq = jnp.stack(quads, axis=0)                                # (4, 4*Cin, Cout)
    wq = jnp.pad(wq, ((0, 0), (0, 0), (0, Cout_p - Cout))).astype(jnp.bfloat16)

    b_p = jnp.pad(bias.astype(jnp.float32), (0, Cout_p - Cout)).reshape(1, Cout_p)

    cparams = pltpu.CompilerParams(
        dimension_semantics=("parallel", "parallel"),
        vmem_limit_bytes=32 * 1024 * 1024)
    grid = (N, n_tiles)

    # ---- pass 1: conv + bias + per-tile channel stats ----
    conv_out, stats = pl.pallas_call(
        _conv_stats_kernel,
        grid=grid,
        in_specs=[
            pl.BlockSpec((None, H + 2, W + 2, Cin), lambda n, t: (n, 0, 0, 0)),
            pl.BlockSpec((4, 4 * Cin, Cout_p), lambda n, t: (0, 0, 0)),
            pl.BlockSpec((1, Cout_p), lambda n, t: (0, 0)),
        ],
        out_specs=(
            pl.BlockSpec((None, 4, MQ, Cout_p), lambda n, t: (n, 0, t, 0)),
            pl.BlockSpec((None, None, 2, Cout_p), lambda n, t: (n, t, 0, 0)),
        ),
        out_shape=(
            jax.ShapeDtypeStruct((N, 4, H * W, Cout_p), jnp.float32),
            jax.ShapeDtypeStruct((N, n_tiles, 2, Cout_p), jnp.float32),
        ),
        compiler_params=cparams,
    )(xp, wq, b_p)

    # ---- BatchNorm (training-mode batch statistics): finalize global mean / var ----
    # TODO(synk): running_mean/running_var buffer updates are not modeled (forward output
    # in training mode does not depend on them).
    cnt = jnp.float32(N * Hp * Wp)
    s1 = jnp.sum(stats[:, :, 0, :], axis=(0, 1))
    s2 = jnp.sum(stats[:, :, 1, :], axis=(0, 1))
    mean = s1 / cnt
    var = jnp.maximum(s2 / cnt - mean * mean, 0.0)               # biased variance
    g_p = jnp.pad(gamma.astype(jnp.float32), (0, Cout_p - Cout))
    be_p = jnp.pad(beta.astype(jnp.float32), (0, Cout_p - Cout))
    scale_v = g_p * jax.lax.rsqrt(var + EPS)
    shift_v = be_p - mean * scale_v
    scale = scale_v.reshape(1, 1, Cout_p)
    shift = shift_v.reshape(1, 1, Cout_p)

    # ---- pass 2: normalize + ReLU, in place over the conv buffer ----
    out_q = pl.pallas_call(
        _bn_relu_kernel,
        grid=grid,
        in_specs=[
            pl.BlockSpec((None, 4, MQ, Cout_p), lambda n, t: (n, 0, t, 0)),
            pl.BlockSpec((1, 1, Cout_p), lambda n, t: (0, 0, 0)),
            pl.BlockSpec((1, 1, Cout_p), lambda n, t: (0, 0, 0)),
        ],
        out_specs=pl.BlockSpec((None, 4, MQ, Cout_p), lambda n, t: (n, 0, t, 0)),
        out_shape=jax.ShapeDtypeStruct((N, 4, H * W, Cout_p), jnp.float32),
        input_output_aliases={0: 0},
        compiler_params=cparams,
    )(conv_out, scale, shift)

    # ---- reassemble parity quadrants -> NCHW (pure XLA glue) ----
    o = out_q.reshape(N, 2, 2, H, W, Cout_p)                     # (N, pr, pc, q, m, C)
    o = jnp.transpose(o, (0, 3, 1, 4, 2, 5)).reshape(N, Hp, Wp, Cout_p)
    return jnp.transpose(o[:, :, :, :Cout], (0, 3, 1, 2))        # (N, Cout, Hp, Wp)


def ref_forward(x, w, b, gamma, beta):
    """Pure-JAX reference mirroring the PyTorch module (training-mode BN).  Conv operands
    are rounded through bf16 exactly like the kernel's MXU operands."""
    xb = x.astype(jnp.bfloat16).astype(jnp.float32)
    wb = w.astype(jnp.bfloat16).astype(jnp.float32)
    xu = jnp.repeat(jnp.repeat(xb, 2, axis=2), 2, axis=3)
    y = jax.lax.conv_general_dilated(
        xu, wb, window_strides=(1, 1), padding=((1, 1), (1, 1)),
        dimension_numbers=("NCHW", "OIHW", "NCHW"))
    y = y + b[None, :, None, None]
    mean = jnp.mean(y, axis=(0, 2, 3), keepdims=True)
    var = jnp.mean((y - mean) ** 2, axis=(0, 2, 3), keepdims=True)
    y = (y - mean) * jax.lax.rsqrt(var + EPS)
    y = y * gamma[None, :, None, None] + beta[None, :, None, None]
    return jnp.maximum(y, 0.0)


if __name__ == "__main__":
    key = jax.random.PRNGKey(0)
    N, Cin, Cout, H, W = 2, 4, 8, 16, 16

    kx, kw, kb, kg, kbe = jax.random.split(key, 5)
    x = jax.random.normal(kx, (N, Cin, H, W), dtype=jnp.float32)

    fan_in = Cin * 3 * 3
    bound = 1.0 / (fan_in ** 0.5)
    w = jax.random.uniform(kw, (Cout, Cin, 3, 3), jnp.float32, -bound, bound)
    b = jax.random.uniform(kb, (Cout,), jnp.float32, -bound, bound)
    gamma = jax.random.uniform(kg, (Cout,), jnp.float32, 0.5, 1.5)
    beta = jax.random.uniform(kbe, (Cout,), jnp.float32, -0.5, 0.5)

    fwd = jax.jit(unet_up_conv_block, static_argnames=("block_rows",))
    out = jax.block_until_ready(fwd(x, w, b, gamma, beta, block_rows=8))  # 4 row tiles

    ref = ref_forward(x, w, b, gamma, beta)
    assert out.shape == (N, Cout, 2 * H, 2 * W), out.shape
    err = float(jnp.max(jnp.abs(out - ref)))
    assert err < 2e-2, err

    print("KERNEL_OK")
</pallas_src>

<mosaic_0001>
module attributes {stable_mosaic.version = 11 : i64} {
  func.func @_conv_stats_kernel(%arg0: i32, %arg1: i32, %arg2: memref<1x18x18x4xbf16, #tpu.memory_space<vmem>>, %arg3: memref<4x16x128xbf16, #tpu.memory_space<vmem>>, %arg4: memref<1x128xf32, #tpu.memory_space<vmem>>, %arg5: memref<1x4x64x128xf32, #tpu.memory_space<vmem>>, %arg6: memref<1x1x2x128xf32, #tpu.memory_space<vmem>>) attributes {dimension_semantics = [#tpu.dimension_semantics<parallel>, #tpu.dimension_semantics<parallel>], iteration_bounds = array<i64: 2, 4>, scalar_prefetch = 0 : i64, scratch_operands = 0 : i64, tpu.core_type = #tpu.core_type<tc>, window_params = [{transform_indices = @transform_0, window_bounds = array<i64: 1, 18, 18, 4>}, {pipeline_mode = #tpu.pipeline_mode<synchronous>, transform_indices = @transform_1, window_bounds = array<i64: 4, 16, 128>}, {pipeline_mode = #tpu.pipeline_mode<synchronous>, transform_indices = @transform_2, window_bounds = array<i64: 1, 128>}, {transform_indices = @transform_3, window_bounds = array<i64: 1, 4, 64, 128>}, {transform_indices = @transform_4, window_bounds = array<i64: 1, 1, 2, 128>}]} {
    %c4_i32 = arith.constant 4 : i32
    %0 = arith.muli %arg1, %c4_i32 : i32
    %c0 = arith.constant 0 : index
    %1 = arith.index_cast %0 : i32 to index
    %c0_0 = arith.constant 0 : index
    %c0_1 = arith.constant 0 : index
    %2 = vector.load %arg2[%c0, %1, %c0_0, %c0_1] : memref<1x18x18x4xbf16, #tpu.memory_space<vmem>>, vector<1x6x18x4xbf16>
    %3 = vector.shape_cast %2 : vector<1x6x18x4xbf16> to vector<6x18x4xbf16>
    %c0_2 = arith.constant 0 : index
    %c0_3 = arith.constant 0 : index
    %4 = vector.load %arg4[%c0_2, %c0_3] : memref<1x128xf32, #tpu.memory_space<vmem>>, vector<1x128xf32>
    %cst = arith.constant 0.000000e+00 : f32
    %5 = vector.broadcast %cst : f32 to vector<1x128xf32>
    %cst_4 = arith.constant 0.000000e+00 : f32
    %6 = vector.broadcast %cst_4 : f32 to vector<1x128xf32>
    %7 = vector.extract_strided_slice %3 {offsets = [0, 0, 0], sizes = [4, 16, 4], strides = [1, 1, 1]} : vector<6x18x4xbf16> to vector<4x16x4xbf16>
    %8 = vector.shape_cast %7 : vector<4x16x4xbf16> to vector<64x4xbf16>
    %9 = vector.extract_strided_slice %3 {offsets = [0, 1, 0], sizes = [4, 16, 4], strides = [1, 1, 1]} : vector<6x18x4xbf16> to vector<4x16x4xbf16>
    %10 = vector.shape_cast %9 : vector<4x16x4xbf16> to vector<64x4xbf16>
    %11 = vector.extract_strided_slice %3 {offsets = [1, 0, 0], sizes = [4, 16, 4], strides = [1, 1, 1]} : vector<6x18x4xbf16> to vector<4x16x4xbf16>
    %12 = vector.shape_cast %11 : vector<4x16x4xbf16> to vector<64x4xbf16>
    %13 = vector.extract_strided_slice %3 {offsets = [1, 1, 0], sizes = [4, 16, 4], strides = [1, 1, 1]} : vector<6x18x4xbf16> to vector<4x16x4xbf16>
    %14 = vector.shape_cast %13 : vector<4x16x4xbf16> to vector<64x4xbf16>
    %15 = tpu.concatenate %8, %10, %12, %14 in 1 : vector<64x4xbf16>, vector<64x4xbf16>, vector<64x4xbf16>, vector<64x4xbf16> -> vector<64x16xbf16>
    %c0_5 = arith.constant 0 : index
    %c0_6 = arith.constant 0 : index
    %c0_7 = arith.constant 0 : index
    %16 = vector.load %arg3[%c0_5, %c0_6, %c0_7] : memref<4x16x128xbf16, #tpu.memory_space<vmem>>, vector<1x16x128xbf16>
    %17 = vector.shape_cast %16 : vector<1x16x128xbf16> to vector<16x128xbf16>
    %cst_8 = arith.constant dense<0.000000e+00> : vector<64x128xf32>
    %18 = tpu.matmul %15, %17, %cst_8 {dimension_numbers = #tpu.dot_dimension_numbers<[1], [0], [0], [1], [0, 0, 1, 1], [], []>} : vector<64x16xbf16>, vector<16x128xbf16>, vector<64x128xf32> -> vector<64x128xf32>
    %19 = vector.broadcast %4 : vector<1x128xf32> to vector<64x128xf32>
    %20 = arith.addf %18, %19 : vector<64x128xf32>
    %c0_9 = arith.constant 0 : index
    %c0_10 = arith.constant 0 : index
    %c0_11 = arith.constant 0 : index
    %c0_12 = arith.constant 0 : index
    %21 = vector.load %arg5[%c0_9, %c0_10, %c0_11, %c0_12] : memref<1x4x64x128xf32, #tpu.memory_space<vmem>>, vector<1x1x64x128xf32>
    %22 = vector.shape_cast %21 : vector<1x1x64x128xf32> to vector<64x128xf32>
    %23 = vector.shape_cast %20 : vector<64x128xf32> to vector<1x1x64x128xf32>
    tpu.vector_store %arg5[%c0_9, %c0_10, %c0_11, %c0_12], %23 {strides = array<i32>} : memref<1x4x64x128xf32, #tpu.memory_space<vmem>>, vector<1x1x64x128xf32>,
    %cst_13 = arith.constant dense<0.000000e+00> : vector<128xf32>
    %24 = vector.multi_reduction <add>, %20, %cst_13 [0] : vector<64x128xf32> to vector<128xf32>
    %25 = vector.shape_cast %24 : vector<128xf32> to vector<1x128xf32>
    %26 = arith.addf %5, %25 : vector<1x128xf32>
    %27 = arith.mulf %20, %20 : vector<64x128xf32>
    %cst_14 = arith.constant dense<0.000000e+00> : vector<128xf32>
    %28 = vector.multi_reduction <add>, %27, %cst_14 [0] : vector<64x128xf32> to vector<128xf32>
    %29 = vector.shape_cast %28 : vector<128xf32> to vector<1x128xf32>
    %30 = arith.addf %6, %29 : vector<1x128xf32>
    %31 = vector.extract_strided_slice %3 {offsets = [0, 1, 0], sizes = [4, 16, 4], strides = [1, 1, 1]} : vector<6x18x4xbf16> to vector<4x16x4xbf16>
    %32 = vector.shape_cast %31 : vector<4x16x4xbf16> to vector<64x4xbf16>
    %33 = vector.extract_strided_slice %3 {offsets = [0, 2, 0], sizes = [4, 16, 4], strides = [1, 1, 1]} : vector<6x18x4xbf16> to vector<4x16x4xbf16>
    %34 = vector.shape_cast %33 : vector<4x16x4xbf16> to vector<64x4xbf16>
    %35 = vector.extract_strided_slice %3 {offsets = [1, 1, 0], sizes = [4, 16, 4], strides = [1, 1, 1]} : vector<6x18x4xbf16> to vector<4x16x4xbf16>
    %36 = vector.shape_cast %35 : vector<4x16x4xbf16> to vector<64x4xbf16>
    %37 = vector.extract_strided_slice %3 {offsets = [1, 2, 0], sizes = [4, 16, 4], strides = [1, 1, 1]} : vector<6x18x4xbf16> to vector<4x16x4xbf16>
    %38 = vector.shape_cast %37 : vector<4x16x4xbf16> to vector<64x4xbf16>
    %39 = tpu.concatenate %32, %34, %36, %38 in 1 : vector<64x4xbf16>, vector<64x4xbf16>, vector<64x4xbf16>, vector<64x4xbf16> -> vector<64x16xbf16>
    %c1 = arith.constant 1 : index
    %c0_15 = arith.constant 0 : index
    %c0_16 = arith.constant 0 : index
    %40 = vector.load %arg3[%c1, %c0_15, %c0_16] : memref<4x16x128xbf16, #tpu.memory_space<vmem>>, vector<1x16x128xbf16>
    %41 = vector.shape_cast %40 : vector<1x16x128xbf16> to vector<16x128xbf16>
    %cst_17 = arith.constant dense<0.000000e+00> : vector<64x128xf32>
    %42 = tpu.matmul %39, %41, %cst_17 {dimension_numbers = #tpu.dot_dimension_numbers<[1], [0], [0], [1], [0, 0, 1, 1], [], []>} : vector<64x16xbf16>, vector<16x128xbf16>, vector<64x128xf32> -> vector<64x128xf32>
    %43 = vector.broadcast %4 : vector<1x128xf32> to vector<64x128xf32>
    %44 = arith.addf %42, %43 : vector<64x128xf32>
    %c0_18 = arith.constant 0 : index
    %c1_19 = arith.constant 1 : index
    %c0_20 = arith.constant 0 : index
    %c0_21 = arith.constant 0 : index
    %45 = vector.load %arg5[%c0_18, %c1_19, %c0_20, %c0_21] : memref<1x4x64x128xf32, #tpu.memory_space<vmem>>, vector<1x1x64x128xf32>
    %46 = vector.shape_cast %45 : vector<1x1x64x128xf32> to vector<64x128xf32>
    %47 = vector.shape_cast %44 : vector<64x128xf32> to vector<1x1x64x128xf32>
    tpu.vector_store %arg5[%c0_18, %c1_19, %c0_20, %c0_21], %47 {strides = array<i32>} : memref<1x4x64x128xf32, #tpu.memory_space<vmem>>, vector<1x1x64x128xf32>,
    %cst_22 = arith.constant dense<0.000000e+00> : vector<128xf32>
    %48 = vector.multi_reduction <add>, %44, %cst_22 [0] : vector<64x128xf32> to vector<128xf32>
    %49 = vector.shape_cast %48 : vector<128xf32> to vector<1x128xf32>
    %50 = arith.addf %26, %49 : vector<1x128xf32>
    %51 = arith.mulf %44, %44 : vector<64x128xf32>
    %cst_23 = arith.constant dense<0.000000e+00> : vector<128xf32>
    %52 = vector.multi_reduction <add>, %51, %cst_23 [0] : vector<64x128xf32> to vector<128xf32>
    %53 = vector.shape_cast %52 : vector<128xf32> to vector<1x128xf32>
    %54 = arith.addf %30, %53 : vector<1x128xf32>
    %55 = vector.extract_strided_slice %3 {offsets = [1, 0, 0], sizes = [4, 16, 4], strides = [1, 1, 1]} : vector<6x18x4xbf16> to vector<4x16x4xbf16>
    %56 = vector.shape_cast %55 : vector<4x16x4xbf16> to vector<64x4xbf16>
    %57 = vector.extract_strided_slice %3 {offsets = [1, 1, 0], sizes = [4, 16, 4], strides = [1, 1, 1]} : vector<6x18x4xbf16> to vector<4x16x4xbf16>
    %58 = vector.shape_cast %57 : vector<4x16x4xbf16> to vector<64x4xbf16>
    %59 = vector.extract_strided_slice %3 {offsets = [2, 0, 0], sizes = [4, 16, 4], strides = [1, 1, 1]} : vector<6x18x4xbf16> to vector<4x16x4xbf16>
    %60 = vector.shape_cast %59 : vector<4x16x4xbf16> to vector<64x4xbf16>
    %61 = vector.extract_strided_slice %3 {offsets = [2, 1, 0], sizes = [4, 16, 4], strides = [1, 1, 1]} : vector<6x18x4xbf16> to vector<4x16x4xbf16>
    %62 = vector.shape_cast %61 : vector<4x16x4xbf16> to vector<64x4xbf16>
    %63 = tpu.concatenate %56, %58, %60, %62 in 1 : vector<64x4xbf16>, vector<64x4xbf16>, vector<64x4xbf16>, vector<64x4xbf16> -> vector<64x16xbf16>
    %c2 = arith.constant 2 : index
    %c0_24 = arith.constant 0 : index
    %c0_25 = arith.constant 0 : index
    %64 = vector.load %arg3[%c2, %c0_24, %c0_25] : memref<4x16x128xbf16, #tpu.memory_space<vmem>>, vector<1x16x128xbf16>
    %65 = vector.shape_cast %64 : vector<1x16x128xbf16> to vector<16x128xbf16>
    %cst_26 = arith.constant dense<0.000000e+00> : vector<64x128xf32>
    %66 = tpu.matmul %63, %65, %cst_26 {dimension_numbers = #tpu.dot_dimension_numbers<[1], [0], [0], [1], [0, 0, 1, 1], [], []>} : vector<64x16xbf16>, vector<16x128xbf16>, vector<64x128xf32> -> vector<64x128xf32>
    %67 = vector.broadcast %4 : vector<1x128xf32> to vector<64x128xf32>
    %68 = arith.addf %66, %67 : vector<64x128xf32>
    %c0_27 = arith.constant 0 : index
    %c2_28 = arith.constant 2 : index
    %c0_29 = arith.constant 0 : index
    %c0_30 = arith.constant 0 : index
    %69 = vector.load %arg5[%c0_27, %c2_28, %c0_29, %c0_30] : memref<1x4x64x128xf32, #tpu.memory_space<vmem>>, vector<1x1x64x128xf32>
    %70 = vector.shape_cast %69 : vector<1x1x64x128xf32> to vector<64x128xf32>
    %71 = vector.shape_cast %68 : vector<64x128xf32> to vector<1x1x64x128xf32>
    tpu.vector_store %arg5[%c0_27, %c2_28, %c0_29, %c0_30], %71 {strides = array<i32>} : memref<1x4x64x128xf32, #tpu.memory_space<vmem>>, vector<1x1x64x128xf32>,
    %cst_31 = arith.constant dense<0.000000e+00> : vector<128xf32>
    %72 = vector.multi_reduction <add>, %68, %cst_31 [0] : vector<64x128xf32> to vector<128xf32>
    %73 = vector.shape_cast %72 : vector<128xf32> to vector<1x128xf32>
    %74 = arith.addf %50, %73 : vector<1x128xf32>
    %75 = arith.mulf %68, %68 : vector<64x128xf32>
    %cst_32 = arith.constant dense<0.000000e+00> : vector<128xf32>
    %76 = vector.multi_reduction <add>, %75, %cst_32 [0] : vector<64x128xf32> to vector<128xf32>
    %77 = vector.shape_cast %76 : vector<128xf32> to vector<1x128xf32>
    %78 = arith.addf %54, %77 : vector<1x128xf32>
    %79 = vector.extract_strided_slice %3 {offsets = [1, 1, 0], sizes = [4, 16, 4], strides = [1, 1, 1]} : vector<6x18x4xbf16> to vector<4x16x4xbf16>
    %80 = vector.shape_cast %79 : vector<4x16x4xbf16> to vector<64x4xbf16>
    %81 = vector.extract_strided_slice %3 {offsets = [1, 2, 0], sizes = [4, 16, 4], strides = [1, 1, 1]} : vector<6x18x4xbf16> to vector<4x16x4xbf16>
    %82 = vector.shape_cast %81 : vector<4x16x4xbf16> to vector<64x4xbf16>
    %83 = vector.extract_strided_slice %3 {offsets = [2, 1, 0], sizes = [4, 16, 4], strides = [1, 1, 1]} : vector<6x18x4xbf16> to vector<4x16x4xbf16>
    %84 = vector.shape_cast %83 : vector<4x16x4xbf16> to vector<64x4xbf16>
    %85 = vector.extract_strided_slice %3 {offsets = [2, 2, 0], sizes = [4, 16, 4], strides = [1, 1, 1]} : vector<6x18x4xbf16> to vector<4x16x4xbf16>
    %86 = vector.shape_cast %85 : vector<4x16x4xbf16> to vector<64x4xbf16>
    %87 = tpu.concatenate %80, %82, %84, %86 in 1 : vector<64x4xbf16>, vector<64x4xbf16>, vector<64x4xbf16>, vector<64x4xbf16> -> vector<64x16xbf16>
    %c3 = arith.constant 3 : index
    %c0_33 = arith.constant 0 : index
    %c0_34 = arith.constant 0 : index
    %88 = vector.load %arg3[%c3, %c0_33, %c0_34] : memref<4x16x128xbf16, #tpu.memory_space<vmem>>, vector<1x16x128xbf16>
    %89 = vector.shape_cast %88 : vector<1x16x128xbf16> to vector<16x128xbf16>
    %cst_35 = arith.constant dense<0.000000e+00> : vector<64x128xf32>
    %90 = tpu.matmul %87, %89, %cst_35 {dimension_numbers = #tpu.dot_dimension_numbers<[1], [0], [0], [1], [0, 0, 1, 1], [], []>} : vector<64x16xbf16>, vector<16x128xbf16>, vector<64x128xf32> -> vector<64x128xf32>
    %91 = vector.broadcast %4 : vector<1x128xf32> to vector<64x128xf32>
    %92 = arith.addf %90, %91 : vector<64x128xf32>
    %c0_36 = arith.constant 0 : index
    %c3_37 = arith.constant 3 : index
    %c0_38 = arith.constant 0 : index
    %c0_39 = arith.constant 0 : index
    %93 = vector.load %arg5[%c0_36, %c3_37, %c0_38, %c0_39] : memref<1x4x64x128xf32, #tpu.memory_space<vmem>>, vector<1x1x64x128xf32>
    %94 = vector.shape_cast %93 : vector<1x1x64x128xf32> to vector<64x128xf32>
    %95 = vector.shape_cast %92 : vector<64x128xf32> to vector<1x1x64x128xf32>
    tpu.vector_store %arg5[%c0_36, %c3_37, %c0_38, %c0_39], %95 {strides = array<i32>} : memref<1x4x64x128xf32, #tpu.memory_space<vmem>>, vector<1x1x64x128xf32>,
    %cst_40 = arith.constant dense<0.000000e+00> : vector<128xf32>
    %96 = vector.multi_reduction <add>, %92, %cst_40 [0] : vector<64x128xf32> to vector<128xf32>
    %97 = vector.shape_cast %96 : vector<128xf32> to vector<1x128xf32>
    %98 = arith.addf %74, %97 : vector<1x128xf32>
    %99 = arith.mulf %92, %92 : vector<64x128xf32>
    %cst_41 = arith.constant dense<0.000000e+00> : vector<128xf32>
    %100 = vector.multi_reduction <add>, %99, %cst_41 [0] : vector<64x128xf32> to vector<128xf32>
    %101 = vector.shape_cast %100 : vector<128xf32> to vector<1x128xf32>
    %102 = arith.addf %78, %101 : vector<1x128xf32>
    %c0_42 = arith.constant 0 : index
    %c0_43 = arith.constant 0 : index
    %c0_44 = arith.constant 0 : index
    %c0_45 = arith.constant 0 : index
    %103 = vector.load %arg6[%c0_42, %c0_43, %c0_44, %c0_45] : memref<1x1x2x128xf32, #tpu.memory_space<vmem>>, vector<1x1x1x128xf32>
    %104 = vector.shape_cast %103 : vector<1x1x1x128xf32> to vector<1x128xf32>
    %105 = vector.shape_cast %98 : vector<1x128xf32> to vector<1x1x1x128xf32>
    tpu.vector_store %arg6[%c0_42, %c0_43, %c0_44, %c0_45], %105 {strides = array<i32>} : memref<1x1x2x128xf32, #tpu.memory_space<vmem>>, vector<1x1x1x128xf32>,
    %c0_46 = arith.constant 0 : index
    %c0_47 = arith.constant 0 : index
    %c1_48 = arith.constant 1 : index
    %c0_49 = arith.constant 0 : index
    %106 = vector.load %arg6[%c0_46, %c0_47, %c1_48, %c0_49] : memref<1x1x2x128xf32, #tpu.memory_space<vmem>>, vector<1x1x1x128xf32>
    %107 = vector.shape_cast %106 : vector<1x1x1x128xf32> to vector<1x128xf32>
    %108 = vector.shape_cast %102 : vector<1x128xf32> to vector<1x1x1x128xf32>
    tpu.vector_store %arg6[%c0_46, %c0_47, %c1_48, %c0_49], %108 {strides = array<i32>} : memref<1x1x2x128xf32, #tpu.memory_space<vmem>>, vector<1x1x1x128xf32>,
    return
  }
  func.func @transform_0(%arg0: i32, %arg1: i32) -> (i32, i32, i32, i32) {
    %c0_i32 = arith.constant 0 : i32
    %c0_i32_0 = arith.constant 0 : i32
    %c0_i32_1 = arith.constant 0 : i32
    %c0_i32_2 = arith.constant 0 : i32
    return %arg0, %c0_i32, %c0_i32_0, %c0_i32_1 : i32, i32, i32, i32
  }
  func.func @transform_1(%arg0: i32, %arg1: i32) -> (i32, i32, i32) {
    %c0_i32 = arith.constant 0 : i32
    %c0_i32_0 = arith.constant 0 : i32
    %c0_i32_1 = arith.constant 0 : i32
    %c0_i32_2 = arith.constant 0 : i32
    return %c0_i32, %c0_i32_0, %c0_i32_1 : i32, i32, i32
  }
  func.func @transform_2(%arg0: i32, %arg1: i32) -> (i32, i32) {
    %c0_i32 = arith.constant 0 : i32
    %c0_i32_0 = arith.constant 0 : i32
    %c0_i32_1 = arith.constant 0 : i32
    return %c0_i32, %c0_i32_0 : i32, i32
  }
  func.func @transform_3(%arg0: i32, %arg1: i32) -> (i32, i32, i32, i32) {
    %c0_i32 = arith.constant 0 : i32
    %c0_i32_0 = arith.constant 0 : i32
    %c0_i32_1 = arith.constant 0 : i32
    return %arg0, %c0_i32, %arg1, %c0_i32_0 : i32, i32, i32, i32
  }
  func.func @transform_4(%arg0: i32, %arg1: i32) -> (i32, i32, i32, i32) {
    %c0_i32 = arith.constant 0 : i32
    %c0_i32_0 = arith.constant 0 : i32
    %c0_i32_1 = arith.constant 0 : i32
    return %arg0, %arg1, %c0_i32, %c0_i32_0 : i32, i32, i32, i32
  }
}

module attributes {stable_mosaic.version = 11 : i64} {
  func.func @_bn_relu_kernel(%arg0: i32, %arg1: i32, %arg2: memref<1x4x64x128xf32, #tpu.memory_space<vmem>>, %arg3: memref<1x1x128xf32, #tpu.memory_space<vmem>>, %arg4: memref<1x1x128xf32, #tpu.memory_space<vmem>>, %arg5: memref<1x4x64x128xf32, #tpu.memory_space<vmem>>) attributes {dimension_semantics = [#tpu.dimension_semantics<parallel>, #tpu.dimension_semantics<parallel>], iteration_bounds = array<i64: 2, 4>, scalar_prefetch = 0 : i64, scratch_operands = 0 : i64, tpu.core_type = #tpu.core_type<tc>, window_params = [{transform_indices = @transform_0, window_bounds = array<i64: 1, 4, 64, 128>}, {pipeline_mode = #tpu.pipeline_mode<synchronous>, transform_indices = @transform_1, window_bounds = array<i64: 1, 1, 128>}, {pipeline_mode = #tpu.pipeline_mode<synchronous>, transform_indices = @transform_2, window_bounds = array<i64: 1, 1, 128>}, {transform_indices = @transform_3, window_bounds = array<i64: 1, 4, 64, 128>}]} {
    %c0 = arith.constant 0 : index
    %c0_0 = arith.constant 0 : index
    %c0_1 = arith.constant 0 : index
    %c0_2 = arith.constant 0 : index
    %0 = vector.load %arg2[%c0, %c0_0, %c0_1, %c0_2] : memref<1x4x64x128xf32, #tpu.memory_space<vmem>>, vector<1x4x64x128xf32>
    %1 = vector.shape_cast %0 : vector<1x4x64x128xf32> to vector<4x64x128xf32>
    %c0_3 = arith.constant 0 : index
    %c0_4 = arith.constant 0 : index
    %c0_5 = arith.constant 0 : index
    %2 = vector.load %arg3[%c0_3, %c0_4, %c0_5] : memref<1x1x128xf32, #tpu.memory_space<vmem>>, vector<1x1x128xf32>
    %3 = vector.broadcast %2 : vector<1x1x128xf32> to vector<4x64x128xf32>
    %4 = arith.mulf %1, %3 : vector<4x64x128xf32>
    %c0_6 = arith.constant 0 : index
    %c0_7 = arith.constant 0 : index
    %c0_8 = arith.constant 0 : index
    %5 = vector.load %arg4[%c0_6, %c0_7, %c0_8] : memref<1x1x128xf32, #tpu.memory_space<vmem>>, vector<1x1x128xf32>
    %6 = vector.broadcast %5 : vector<1x1x128xf32> to vector<4x64x128xf32>
    %7 = arith.addf %4, %6 : vector<4x64x128xf32>
    %cst = arith.constant 0.000000e+00 : f32
    %8 = vector.broadcast %cst : f32 to vector<4x64x128xf32>
    %9 = arith.maximumf %7, %8 : vector<4x64x128xf32>
    %c0_9 = arith.constant 0 : index
    %c0_10 = arith.constant 0 : index
    %c0_11 = arith.constant 0 : index
    %c0_12 = arith.constant 0 : index
    %10 = vector.load %arg5[%c0_9, %c0_10, %c0_11, %c0_12] : memref<1x4x64x128xf32, #tpu.memory_space<vmem>>, vector<1x4x64x128xf32>
    %11 = vector.shape_cast %10 : vector<1x4x64x128xf32> to vector<4x64x128xf32>
    %12 = vector.shape_cast %9 : vector<4x64x128xf32> to vector<1x4x64x128xf32>
    tpu.vector_store %arg5[%c0_9, %c0_10, %c0_11, %c0_12], %12 {strides = array<i32>} : memref<1x4x64x128xf32, #tpu.memory_space<vmem>>, vector<1x4x64x128xf32>,
    return
  }
  func.func @transform_0(%arg0: i32, %arg1: i32) -> (i32, i32, i32, i32) {
    %c0_i32 = arith.constant 0 : i32
    %c0_i32_0 = arith.constant 0 : i32
    %c0_i32_1 = arith.constant 0 : i32
    return %arg0, %c0_i32, %arg1, %c0_i32_0 : i32, i32, i32, i32
  }
  func.func @transform_1(%arg0: i32, %arg1: i32) -> (i32, i32, i32) {
    %c0_i32 = arith.constant 0 : i32
    %c0_i32_0 = arith.constant 0 : i32
    %c0_i32_1 = arith.constant 0 : i32
    %c0_i32_2 = arith.constant 0 : i32
    return %c0_i32, %c0_i32_0, %c0_i32_1 : i32, i32, i32
  }
  func.func @transform_2(%arg0: i32, %arg1: i32) -> (i32, i32, i32) {
    %c0_i32 = arith.constant 0 : i32
    %c0_i32_0 = arith.constant 0 : i32
    %c0_i32_1 = arith.constant 0 : i32
    %c0_i32_2 = arith.constant 0 : i32
    return %c0_i32, %c0_i32_0, %c0_i32_1 : i32, i32, i32
  }
  func.func @transform_3(%arg0: i32, %arg1: i32) -> (i32, i32, i32, i32) {
    %c0_i32 = arith.constant 0 : i32
    %c0_i32_0 = arith.constant 0 : i32
    %c0_i32_1 = arith.constant 0 : i32
    return %arg0, %c0_i32, %arg1, %c0_i32_0 : i32, i32, i32, i32
  }
}

</mosaic_0001>

<llo_original>
// kernel: unet_up_conv_block.3
$region0: #{unet_up_conv_block.3}
  #allocation0 [shape = 'u32[]', space=smem, size = 0x4, offset = 0x4, fixed_abs, tag = 'smem constant byte address 0x4 - core index']
  #allocation1 [shape = 'u32[144,128]{1,0:T(1,128)}', space=vmem, size = 0x12000, scoped, tag = 'internal scratch']
  %s0 = inlined_call_operand.vmem [shape: f32[2,4,256,128], index: 0, kind: input, shape index: {}, may-alias: {0,3}]
  %s1 = inlined_call_operand.vmem [shape: f32[1,1,128], index: 1, kind: input, shape index: {}]
  %s2 = inlined_call_operand.vmem [shape: f32[1,1,128], index: 2, kind: input, shape index: {}]
  %s3 = inlined_call_operand.vmem [shape: f32[2,4,256,128], index: 3, kind: output, shape index: {}, may-alias: {0,3}]
  %s4 = sld [smem:[#allocation0]]
  $region117: #{unet_up_conv_block.3} parent=0
    _
  %s6 = ssub.s32 1, %s4
  %s7 = scalar_select 0, %s6, %s4
  $region1: #{unet_up_conv_block.3} parent=0
    #allocation2 [shape = 'u8[262144]{0}', space=vmem, size = 0x40000, scoped, tag = 'input window, operand 0']
    #allocation3 [shape = 'u8[262144]{0}', space=vmem, size = 0x40000, scoped, tag = 'output window, operand 0']
    loop: start=0, step=1, limit=10
    $region2: #{unet_up_conv_block.3} parent=1 // loop_pre_header
      _
    $region3: #{unet_up_conv_block.3} parent=1 // loop_header
      %s9 = sphi 0, %s13
      %p10 = scmp.ge.s32.totalorder %s9, 10
      %s16 = sphi 0, %s28
      %s17 = sphi 0, %s24
      %s18 = sphi 0, %s16
      %s19 = sphi 0, %s17
      %s20 = sphi 0, %s18
      %s21 = sphi 0, %s19
      %s33 = sphi 0, %s35
      %s36 = sphi 0, %s33
      %s37 = sphi 0, %s36
      %s53 = sphi 0, %s37
      %s57 = sphi 0, %s57
      %s59 = sphi 0, %s57
      %s60 = sphi 0, %s59
      %s74 = sphi 0, %s60
      %s78 = sphi 0, %s78
      %s80 = sphi 0, %s78
      %s81 = sphi 0, %s80
      %s95 = sphi 0, %s81
      %s103 = sphi 0, %s105
      %s106 = sphi 0, %s103
      %s107 = sphi 0, %s106
      %s123 = sphi 0, %s107
    $region4: #{unet_up_conv_block.3} parent=1 // loop_header_branch
      %12 = sbr.rel (%p10) target = $region8
    $region5: #{unet_up_conv_block.3} parent=1 // loop_body
      %s14 = ssub.s32 %s9, 1
      %s15 = ssub.s32 %s9, 2
      %s22 = sadd.s32 1, %s17
      %p23 = scmp.ge.s32.totalorder %s22, 4
      %s24 = scalar_select %p23, 0, %s22
      %s25 = sadd.s32 1, %s16
      %s26 = scalar_select %p23, %s25, %s16
      %p27 = scmp.ge.s32.totalorder %s26, 2
      %s28 = scalar_select %p27, 0, %s26
      %s29 = ssub.s32 %s16, %s28
      %s30 = ssub.s32 %s17, %s24
      %s31 = sor.u32 %s29, %s30
      %p32 = scmp.eq.s32.totalorder %s31, 0
      %s34 = sadd.s32 %s33, 1
      %s35 = scalar_select %p32, %s33, %s34
      %p38 = pneg %p32
      %p39 = scmp.eq.s32.totalorder %s9, 7
      %p40 = por %p38, %p39
      %p41 = scmp.ne.s32.totalorder %s33, %s36
      %p42 = scmp.eq.s32.totalorder %s9, 0
      %p43 = por %p41, %p42
      %p44 = scmp.ne.s32.totalorder %s33, %s36
      %p45 = scmp.eq.s32.totalorder %s14, 7
      %p46 = por %p44, %p45
      %p47 = scmp.ne.s32.totalorder %s36, %s37
      %p48 = scmp.eq.s32.totalorder %s14, 0
      %p49 = por %p47, %p48
      %p50 = scmp.ne.s32.totalorder %s36, %s37
      %p51 = scmp.eq.s32.totalorder %s15, 7
      %p52 = por %p50, %p51
      %p54 = scmp.ne.s32.totalorder %s37, %s53
      %p55 = scmp.eq.s32.totalorder %s15, 0
      %p56 = por %p54, %p55
      %s58 = sadd.s32 %s57, 1
      %p61 = scmp.eq.s32.totalorder %s9, 7
      %p62 = scmp.ne.s32.totalorder %s57, %s59
      %p63 = scmp.eq.s32.totalorder %s9, 0
      %p64 = por %p62, %p63
      %p65 = scmp.ne.s32.totalorder %s57, %s59
      %p66 = scmp.eq.s32.totalorder %s14, 7
      %p67 = por %p65, %p66
      %p68 = scmp.ne.s32.totalorder %s59, %s60
      %p69 = scmp.eq.s32.totalorder %s14, 0
      %p70 = por %p68, %p69
      %p71 = scmp.ne.s32.totalorder %s59, %s60
      %p72 = scmp.eq.s32.totalorder %s15, 7
      %p73 = por %p71, %p72
      %p75 = scmp.ne.s32.totalorder %s60, %s74
      %p76 = scmp.eq.s32.totalorder %s15, 0
      %p77 = por %p75, %p76
      %s79 = sadd.s32 %s78, 1
      %p82 = scmp.eq.s32.totalorder %s9, 7
      %p83 = scmp.ne.s32.totalorder %s78, %s80
      %p84 = scmp.eq.s32.totalorder %s9, 0
      %p85 = por %p83, %p84
      %p86 = scmp.ne.s32.totalorder %s78, %s80
      %p87 = scmp.eq.s32.totalorder %s14, 7
      %p88 = por %p86, %p87
      %p89 = scmp.ne.s32.totalorder %s80, %s81
      %p90 = scmp.eq.s32.totalorder %s14, 0
      %p91 = por %p89, %p90
      %p92 = scmp.ne.s32.totalorder %s80, %s81
      %p93 = scmp.eq.s32.totalorder %s15, 7
      %p94 = por %p92, %p93
      %p96 = scmp.ne.s32.totalorder %s81, %s95
      %p97 = scmp.eq.s32.totalorder %s15, 0
      %p98 = por %p96, %p97
      %s99 = ssub.s32 %s16, %s28
      %s100 = ssub.s32 %s17, %s24
      %s101 = sor.u32 %s99, %s100
      %p102 = scmp.eq.s32.totalorder %s101, 0
      %s104 = sadd.s32 %s103, 1
      %s105 = scalar_select %p102, %s103, %s104
      %p108 = pneg %p102
      %p109 = scmp.eq.s32.totalorder %s9, 7
      %p110 = por %p108, %p109
      %p111 = scmp.ne.s32.totalorder %s103, %s106
      %p112 = scmp.eq.s32.totalorder %s9, 0
      %p113 = por %p111, %p112
      %p114 = scmp.ne.s32.totalorder %s103, %s106
      %p115 = scmp.eq.s32.totalorder %s14, 7
      %p116 = por %p114, %p115
      %p117 = scmp.ne.s32.totalorder %s106, %s107
      %p118 = scmp.eq.s32.totalorder %s14, 0
      %p119 = por %p117, %p118
      %p120 = scmp.ne.s32.totalorder %s106, %s107
      %p121 = scmp.eq.s32.totalorder %s15, 7
      %p122 = por %p120, %p121
      %p124 = scmp.ne.s32.totalorder %s107, %s123
      %p125 = scmp.eq.s32.totalorder %s15, 0
      %p126 = por %p124, %p125
      %p127 = scmp.le.s32.totalorder 1, %s9
      %p128 = scmp.lt.s32.totalorder %s9, 9
      %p129 = pnand %p127, %p128
      %p130 = pneg %p129
      // Predicated region
      $region9: #{unet_up_conv_block.3} parent=5 // pred_check
        _
      $region10: #{unet_up_conv_block.3} parent=5 // pred_check_branch
        %132 = sbr.rel (%p129) target = $region12
      $region11: #{unet_up_conv_block.3} parent=5 // pred_region
        %s133 = ssub.s32 %s9, 1
        // Predicated region
        $region13: #{unet_up_conv_block.3} parent=11 // pred_check
          %p134 = pneg %p70
        $region14: #{unet_up_conv_block.3} parent=11 // pred_check_branch
          %136 = sbr.rel (%p134) target = $region16
        $region15: #{unet_up_conv_block.3} parent=11 // pred_region
          _
        $region16: #{unet_up_conv_block.3} parent=11 // pred_fallthru
          _
        // Predicated region
        $region17: #{unet_up_conv_block.3} parent=11 // pred_check
          %p137 = pneg %p91
        $region18: #{unet_up_conv_block.3} parent=11 // pred_check_branch
          %139 = sbr.rel (%p137) target = $region20
        $region19: #{unet_up_conv_block.3} parent=11 // pred_region
          _
        $region20: #{unet_up_conv_block.3} parent=11 // pred_fallthru
          _
      $region12: #{unet_up_conv_block.3} parent=5 // pred_fallthru
        _
      %p140 = scmp.lt.s32.totalorder %s9, 8
      // Predicated region
      $region21: #{unet_up_conv_block.3} parent=5 // pred_check
        %p141 = pneg %p140
      $region22: #{unet_up_conv_block.3} parent=5 // pred_check_branch
        %143 = sbr.rel (%p141) target = $region24
      $region23: #{unet_up_conv_block.3} parent=5 // pred_region
        // Predicated region
        $region25: #{unet_up_conv_block.3} parent=23 // pred_check
          %p144 = pneg %p43
        $region26: #{unet_up_conv_block.3} parent=23 // pred_check_branch
          %146 = sbr.rel (%p144) target = $region28
        $region27: #{unet_up_conv_block.3} parent=23 // pred_region
          %s147 = sand.u32 %s33, 1
          %s148 = sand.u32 %s33, 1
          %s149 = smul.addr %s148, 256
          %s150 = scalar_lea.vmem [#allocation2], %s149
          %s151 = smul.u32 8, %s17
          %s152 = smul.addr %s16, 128
          %s153 = sadd.s32 %s151, %s152
          %s154 = smul.addr %s153, 8
          %s155 = scalar_lea.vmem %s0, %s154
          // Predicated region
          $region29: #{unet_up_conv_block.3} parent=27 // pred_check
            _
          $region30: #{unet_up_conv_block.3} parent=27 // pred_check_branch
            %157 = sbr.rel (0) target = $region32
          $region31: #{unet_up_conv_block.3} parent=27 // pred_region
            // Predicated region
            $region33: #{unet_up_conv_block.3} parent=31 // pred_check
              _
            $region34: #{unet_up_conv_block.3} parent=31 // pred_check_branch
              %159 = sbr.rel (0) target = $region36
            $region35: #{unet_up_conv_block.3} parent=31 // pred_region
              // Predicated region
              $region48: #{unet_up_conv_block.3} parent=35 // pred_check
                _
              $region49: #{unet_up_conv_block.3} parent=35 // pred_check_branch
                %237 = sbr.rel (0) target = $region51
              $region50: #{unet_up_conv_block.3} parent=35 // pred_region
                loop: start=0, step=1, limit=1
                $region52: #{unet_up_conv_block.3} parent=50 // loop_pre_header
                  _
                $region53: #{unet_up_conv_block.3} parent=50 // loop_header
                  %s239 = sphi 0, %s243
                  %p240 = scmp.ge.s32.totalorder %s239, 1
                  %s244 = sphi %s155, %s155
                  %s245 = sphi %s150, %s150
                $region54: #{unet_up_conv_block.3} parent=50 // loop_header_branch
                  %242 = sbr.rel (%p240) target = $region58
                $region55: #{unet_up_conv_block.3} parent=50 // loop_body
                  %v246 = vld [vmem:[%s244] sm:$0xff]
                  %247 = vst [vmem:[%s245] sm:$0xff] %v246
                  %v248 = vld [vmem:[%s244 + $0x8] sm:$0xff]
                  %249 = vst [vmem:[%s245 + $0x8] sm:$0xff] %v248
                  %v250 = vld [vmem:[%s244 + $0x10] sm:$0xff]
                  %251 = vst [vmem:[%s245 + $0x10] sm:$0xff] %v250
                  %v252 = vld [vmem:[%s244 + $0x18] sm:$0xff]
                  %253 = vst [vmem:[%s245 + $0x18] sm:$0xff] %v252
                  %v254 = vld [vmem:[%s244 + $0x20] sm:$0xff]
                  %255 = vst [vmem:[%s245 + $0x20] sm:$0xff] %v254
                  %v256 = vld [vmem:[%s244 + $0x28] sm:$0xff]
                  %257 = vst [vmem:[%s245 + $0x28] sm:$0xff] %v256
                  %v258 = vld [vmem:[%s244 + $0x30] sm:$0xff]
                  %259 = vst [vmem:[%s245 + $0x30] sm:$0xff] %v258
                  %v260 = vld [vmem:[%s244 + $0x38] sm:$0xff]
                  %261 = vst [vmem:[%s245 + $0x38] sm:$0xff] %v260
                  %v262 = vld [vmem:[%s244 + $0x100] sm:$0xff]
                  %263 = vst [vmem:[%s245 + $0x40] sm:$0xff] %v262
                  %v264 = vld [vmem:[%s244 + $0x108] sm:$0xff]
                  %265 = vst [vmem:[%s245 + $0x48] sm:$0xff] %v264
                  %v266 = vld [vmem:[%s244 + $0x110] sm:$0xff]
                  %267 = vst [vmem:[%s245 + $0x50] sm:$0xff] %v266
                  %v268 = vld [vmem:[%s244 + $0x118] sm:$0xff]
                  %269 = vst [vmem:[%s245 + $0x58] sm:$0xff] %v268
                  %v270 = vld [vmem:[%s244 + $0x120] sm:$0xff]
                  %271 = vst [vmem:[%s245 + $0x60] sm:$0xff] %v270
                  %v272 = vld [vmem:[%s244 + $0x128] sm:$0xff]
                  %273 = vst [vmem:[%s245 + $0x68] sm:$0xff] %v272
                  %v274 = vld [vmem:[%s244 + $0x130] sm:$0xff]
                  %275 = vst [vmem:[%s245 + $0x70] sm:$0xff] %v274
                  %v276 = vld [vmem:[%s244 + $0x138] sm:$0xff]
                  %277 = vst [vmem:[%s245 + $0x78] sm:$0xff] %v276
                  %v278 = vld [vmem:[%s244 + $0x200] sm:$0xff]
                  %279 = vst [vmem:[%s245 + $0x80] sm:$0xff] %v278
                  %v280 = vld [vmem:[%s244 + $0x208] sm:$0xff]
                  %281 = vst [vmem:[%s245 + $0x88] sm:$0xff] %v280
                  %v282 = vld [vmem:[%s244 + $0x210] sm:$0xff]
                  %283 = vst [vmem:[%s245 + $0x90] sm:$0xff] %v282
                  %v284 = vld [vmem:[%s244 + $0x218] sm:$0xff]
                  %285 = vst [vmem:[%s245 + $0x98] sm:$0xff] %v284
                  %v286 = vld [vmem:[%s244 + $0x220] sm:$0xff]
                  %287 = vst [vmem:[%s245 + $0xa0] sm:$0xff] %v286
                  %v288 = vld [vmem:[%s244 + $0x228] sm:$0xff]
                  %289 = vst [vmem:[%s245 + $0xa8] sm:$0xff] %v288
                  %v290 = vld [vmem:[%s244 + $0x230] sm:$0xff]
                  %291 = vst [vmem:[%s245 + $0xb0] sm:$0xff] %v290
                  %v292 = vld [vmem:[%s244 + $0x238] sm:$0xff]
                  %293 = vst [vmem:[%s245 + $0xb8] sm:$0xff] %v292
                  %v294 = vld [vmem:[%s244 + $0x300] sm:$0xff]
                  %295 = vst [vmem:[%s245 + $0xc0] sm:$0xff] %v294
                  %v296 = vld [vmem:[%s244 + $0x308] sm:$0xff]
                  %297 = vst [vmem:[%s245 + $0xc8] sm:$0xff] %v296
                  %v298 = vld [vmem:[%s244 + $0x310] sm:$0xff]
                  %299 = vst [vmem:[%s245 + $0xd0] sm:$0xff] %v298
                  %v300 = vld [vmem:[%s244 + $0x318] sm:$0xff]
                  %301 = vst [vmem:[%s245 + $0xd8] sm:$0xff] %v300
                  %v302 = vld [vmem:[%s244 + $0x320] sm:$0xff]
                  %303 = vst [vmem:[%s245 + $0xe0] sm:$0xff] %v302
                  %v304 = vld [vmem:[%s244 + $0x328] sm:$0xff]
                  %305 = vst [vmem:[%s245 + $0xe8] sm:$0xff] %v304
                  %v306 = vld [vmem:[%s244 + $0x330] sm:$0xff]
                  %307 = vst [vmem:[%s245 + $0xf0] sm:$0xff] %v306
                  %v308 = vld [vmem:[%s244 + $0x338] sm:$0xff]
                  %309 = vst [vmem:[%s245 + $0xf8] sm:$0xff] %v308
                $region56: #{unet_up_conv_block.3} parent=50 // loop_footer
                  %s243 = sadd.s32 1, %s239
                $region57: #{unet_up_conv_block.3} parent=50 // loop_footer_branch
                  %238 = sbr.rel target = $region53
                $region58: #{unet_up_conv_block.3} parent=50 // loop_exit
                  _
              $region51: #{unet_up_conv_block.3} parent=35 // pred_fallthru
                _
              // Predicated region
              $region59: #{unet_up_conv_block.3} parent=35 // pred_check
                _
              $region60: #{unet_up_conv_block.3} parent=35 // pred_check_branch
                %311 = sbr.rel target = $region62
              $region61: #{unet_up_conv_block.3} parent=35 // pred_region
                _
              $region62: #{unet_up_conv_block.3} parent=35 // pred_fallthru
                _
            $region36: #{unet_up_conv_block.3} parent=31 // pred_fallthru
              _
            // Predicated region
            $region37: #{unet_up_conv_block.3} parent=31 // pred_check
              _
            $region38: #{unet_up_conv_block.3} parent=31 // pred_check_branch
              %161 = sbr.rel target = $region40
            $region39: #{unet_up_conv_block.3} parent=31 // pred_region
              %s163 = ssub.s32 256, 1
              loop: start=0, step=1, limit=1
              $region41: #{unet_up_conv_block.3} parent=39 // loop_pre_header
                _
              $region42: #{unet_up_conv_block.3} parent=39 // loop_header
                %s165 = sphi 0, %s169
                %p166 = scmp.ge.s32.totalorder %s165, 1
                %s170 = sphi %s155, %s155
                %s171 = sphi %s150, %s150
              $region43: #{unet_up_conv_block.3} parent=39 // loop_header_branch
                %168 = sbr.rel (%p166) target = $region47
              $region44: #{unet_up_conv_block.3} parent=39 // loop_body
                %v172 = vld [vmem:[%s170] sm:%s163]
                %173 = vst [vmem:[%s171] sm:%s163] %v172
                %v174 = vld [vmem:[%s170 + $0x8] sm:%s163]
                %175 = vst [vmem:[%s171 + $0x8] sm:%s163] %v174
                %v176 = vld [vmem:[%s170 + $0x10] sm:%s163]
                %177 = vst [vmem:[%s171 + $0x10] sm:%s163] %v176
                %v178 = vld [vmem:[%s170 + $0x18] sm:%s163]
                %179 = vst [vmem:[%s171 + $0x18] sm:%s163] %v178
                %v180 = vld [vmem:[%s170 + $0x20] sm:%s163]
                %181 = vst [vmem:[%s171 + $0x20] sm:%s163] %v180
                %v182 = vld [vmem:[%s170 + $0x28] sm:%s163]
                %183 = vst [vmem:[%s171 + $0x28] sm:%s163] %v182
                %v184 = vld [vmem:[%s170 + $0x30] sm:%s163]
                %185 = vst [vmem:[%s171 + $0x30] sm:%s163] %v184
                %v186 = vld [vmem:[%s170 + $0x38] sm:%s163]
                %187 = vst [vmem:[%s171 + $0x38] sm:%s163] %v186
                %v188 = vld [vmem:[%s170 + $0x100] sm:%s163]
                %189 = vst [vmem:[%s171 + $0x40] sm:%s163] %v188
                %v190 = vld [vmem:[%s170 + $0x108] sm:%s163]
                %191 = vst [vmem:[%s171 + $0x48] sm:%s163] %v190
                %v192 = vld [vmem:[%s170 + $0x110] sm:%s163]
                %193 = vst [vmem:[%s171 + $0x50] sm:%s163] %v192
                %v194 = vld [vmem:[%s170 + $0x118] sm:%s163]
                %195 = vst [vmem:[%s171 + $0x58] sm:%s163] %v194
                %v196 = vld [vmem:[%s170 + $0x120] sm:%s163]
                %197 = vst [vmem:[%s171 + $0x60] sm:%s163] %v196
                %v198 = vld [vmem:[%s170 + $0x128] sm:%s163]
                %199 = vst [vmem:[%s171 + $0x68] sm:%s163] %v198
                %v200 = vld [vmem:[%s170 + $0x130] sm:%s163]
                %201 = vst [vmem:[%s171 + $0x70] sm:%s163] %v200
                %v202 = vld [vmem:[%s170 + $0x138] sm:%s163]
                %203 = vst [vmem:[%s171 + $0x78] sm:%s163] %v202
                %v204 = vld [vmem:[%s170 + $0x200] sm:%s163]
                %205 = vst [vmem:[%s171 + $0x80] sm:%s163] %v204
                %v206 = vld [vmem:[%s170 + $0x208] sm:%s163]
                %207 = vst [vmem:[%s171 + $0x88] sm:%s163] %v206
                %v208 = vld [vmem:[%s170 + $0x210] sm:%s163]
                %209 = vst [vmem:[%s171 + $0x90] sm:%s163] %v208
                %v210 = vld [vmem:[%s170 + $0x218] sm:%s163]
                %211 = vst [vmem:[%s171 + $0x98] sm:%s163] %v210
                %v212 = vld [vmem:[%s170 + $0x220] sm:%s163]
                %213 = vst [vmem:[%s171 + $0xa0] sm:%s163] %v212
                %v214 = vld [vmem:[%s170 + $0x228] sm:%s163]
                %215 = vst [vmem:[%s171 + $0xa8] sm:%s163] %v214
                %v216 = vld [vmem:[%s170 + $0x230] sm:%s163]
                %217 = vst [vmem:[%s171 + $0xb0] sm:%s163] %v216
                %v218 = vld [vmem:[%s170 + $0x238] sm:%s163]
                %219 = vst [vmem:[%s171 + $0xb8] sm:%s163] %v218
                %v220 = vld [vmem:[%s170 + $0x300] sm:%s163]
                %221 = vst [vmem:[%s171 + $0xc0] sm:%s163] %v220
                %v222 = vld [vmem:[%s170 + $0x308] sm:%s163]
                %223 = vst [vmem:[%s171 + $0xc8] sm:%s163] %v222
                %v224 = vld [vmem:[%s170 + $0x310] sm:%s163]
                %225 = vst [vmem:[%s171 + $0xd0] sm:%s163] %v224
                %v226 = vld [vmem:[%s170 + $0x318] sm:%s163]
                %227 = vst [vmem:[%s171 + $0xd8] sm:%s163] %v226
                %v228 = vld [vmem:[%s170 + $0x320] sm:%s163]
                %229 = vst [vmem:[%s171 + $0xe0] sm:%s163] %v228
                %v230 = vld [vmem:[%s170 + $0x328] sm:%s163]
                %231 = vst [vmem:[%s171 + $0xe8] sm:%s163] %v230
                %v232 = vld [vmem:[%s170 + $0x330] sm:%s163]
                %233 = vst [vmem:[%s171 + $0xf0] sm:%s163] %v232
                %v234 = vld [vmem:[%s170 + $0x338] sm:%s163]
                %235 = vst [vmem:[%s171 + $0xf8] sm:%s163] %v234
              $region45: #{unet_up_conv_block.3} parent=39 // loop_footer
                %s169 = sadd.s32 1, %s165
              $region46: #{unet_up_conv_block.3} parent=39 // loop_footer_branch
                %164 = sbr.rel target = $region42
              $region47: #{unet_up_conv_block.3} parent=39 // loop_exit
                _
            $region40: #{unet_up_conv_block.3} parent=31 // pred_fallthru
              _
          $region32: #{unet_up_conv_block.3} parent=27 // pred_fallthru
            _
          %312 = vnop
        $region28: #{unet_up_conv_block.3} parent=23 // pred_fallthru
          _
      $region24: #{unet_up_conv_block.3} parent=5 // pred_fallthru
        _
      %p313 = scmp.le.s32.totalorder 1, %s9
      %p314 = scmp.lt.s32.totalorder %s9, 9
      %p315 = pnand %p313, %p314
      %p316 = pneg %p315
      // Predicated region
      $region63: #{unet_up_conv_block.3} parent=5 // pred_check
        _
      $region64: #{unet_up_conv_block.3} parent=5 // pred_check_branch
        %318 = sbr.rel (%p315) target = $region66
      $region65: #{unet_up_conv_block.3} parent=5 // pred_region
        %s319 = ssub.s32 %s9, 1
        %s320 = sand.u32 %s36, 1
        %s321 = sand.u32 %s36, 1
        %s322 = smul.addr %s321, 256
        %s323 = scalar_lea.vmem [#allocation2], %s322
        // Predicated region
        $region67: #{unet_up_conv_block.3} parent=65 // pred_check
          %p324 = pneg %p49
        $region68: #{unet_up_conv_block.3} parent=65 // pred_check_branch
          %326 = sbr.rel (%p324) target = $region70
        $region69: #{unet_up_conv_block.3} parent=65 // pred_region
          _
        $region70: #{unet_up_conv_block.3} parent=65 // pred_fallthru
          _
        %s327 = sand.u32 %s36, 1
        %s328 = sand.u32 %s36, 1
        %s329 = smul.addr %s328, 256
        %s330 = scalar_lea.vmem [#allocation2], %s329
        %p331 = pneg %p49
        %p332 = pneg %p46
        %p333 = pneg %p70
        %p334 = pneg %p67
        %p335 = pneg %p91
        %p336 = pneg %p88
        %p337 = pneg %p119
        %p338 = pneg %p116
        %s339 = sand.u32 %s106, 1
        %s340 = sand.u32 %s106, 1
        %s341 = smul.addr %s340, 256
        %s342 = scalar_lea.vmem [#allocation3], %s341
        %s343 = smul.u32 8, %s19
        %s344 = smul.u32 8, %s19
        %v345 = vld [vmem:[%s323] sm:$0xff]
        %v346 = vld [vmem:[%s323 + $0x8] sm:$0xff]
        %v347 = vld [vmem:[%s323 + $0x10] sm:$0xff]
        %v348 = vld [vmem:[%s323 + $0x18] sm:$0xff]
        %v349 = vld [vmem:[%s323 + $0x20] sm:$0xff]
        %v350 = vld [vmem:[%s323 + $0x28] sm:$0xff]
        %v351 = vld [vmem:[%s323 + $0x30] sm:$0xff]
        %v352 = vld [vmem:[%s323 + $0x38] sm:$0xff]
        %v353 = vld [vmem:[%s323 + $0x40] sm:$0xff]
        %v354 = vld [vmem:[%s323 + $0x48] sm:$0xff]
        %v355 = vld [vmem:[%s323 + $0x50] sm:$0xff]
        %v356 = vld [vmem:[%s323 + $0x58] sm:$0xff]
        %v357 = vld [vmem:[%s323 + $0x60] sm:$0xff]
        %v358 = vld [vmem:[%s323 + $0x68] sm:$0xff]
        %v359 = vld [vmem:[%s323 + $0x70] sm:$0xff]
        %v360 = vld [vmem:[%s323 + $0x78] sm:$0xff]
        %v361 = vld [vmem:[%s323 + $0x80] sm:$0xff]
        %v362 = vld [vmem:[%s323 + $0x88] sm:$0xff]
        %v363 = vld [vmem:[%s323 + $0x90] sm:$0xff]
        %v364 = vld [vmem:[%s323 + $0x98] sm:$0xff]
        %v365 = vld [vmem:[%s323 + $0xa0] sm:$0xff]
        %v366 = vld [vmem:[%s323 + $0xa8] sm:$0xff]
        %v367 = vld [vmem:[%s323 + $0xb0] sm:$0xff]
        %v368 = vld [vmem:[%s323 + $0xb8] sm:$0xff]
        %v369 = vld [vmem:[%s323 + $0xc0] sm:$0xff]
        %v370 = vld [vmem:[%s323 + $0xc8] sm:$0xff]
        %v371 = vld [vmem:[%s323 + $0xd0] sm:$0xff]
        %v372 = vld [vmem:[%s323 + $0xd8] sm:$0xff]
        %v373 = vld [vmem:[%s323 + $0xe0] sm:$0xff]
        %v374 = vld [vmem:[%s323 + $0xe8] sm:$0xff]
        %v375 = vld [vmem:[%s323 + $0xf0] sm:$0xff]
        %v376 = vld [vmem:[%s323 + $0xf8] sm:$0xff]
        %v377 = vld [vmem:[%s1] sm:$0x1]
        %v379 = vlaneseq
        %v380 = vshrl.u32 %v379, 7
        %v381 = vsub.s32 0, %v380
        %v382 = vrot.slane %v377, %v381
        %v384 = vmul.f32 %v345, %v382
        %v385 = vmul.f32 %v346, %v382
        %v386 = vmul.f32 %v347, %v382
        %v387 = vmul.f32 %v348, %v382
        %v388 = vmul.f32 %v349, %v382
        %v389 = vmul.f32 %v350, %v382
        %v390 = vmul.f32 %v351, %v382
        %v391 = vmul.f32 %v352, %v382
        %v392 = vmul.f32 %v353, %v382
        %v393 = vmul.f32 %v354, %v382
        %v394 = vmul.f32 %v355, %v382
        %v395 = vmul.f32 %v356, %v382
        %v396 = vmul.f32 %v357, %v382
        %v397 = vmul.f32 %v358, %v382
        %v398 = vmul.f32 %v359, %v382
        %v399 = vmul.f32 %v360, %v382
        %v400 = vmul.f32 %v361, %v382
        %v401 = vmul.f32 %v362, %v382
        %v402 = vmul.f32 %v363, %v382
        %v403 = vmul.f32 %v364, %v382
        %v404 = vmul.f32 %v365, %v382
        %v405 = vmul.f32 %v366, %v382
        %v406 = vmul.f32 %v367, %v382
        %v407 = vmul.f32 %v368, %v382
        %v408 = vmul.f32 %v369, %v382
        %v409 = vmul.f32 %v370, %v382
        %v410 = vmul.f32 %v371, %v382
        %v411 = vmul.f32 %v372, %v382
        %v412 = vmul.f32 %v373, %v382
        %v413 = vmul.f32 %v374, %v382
        %v414 = vmul.f32 %v375, %v382
        %v415 = vmul.f32 %v376, %v382
        %v416 = vld [vmem:[%s2] sm:$0x1]
        %v418 = vlaneseq
        %v419 = vshrl.u32 %v418, 7
        %v420 = vsub.s32 0, %v419
        %v421 = vrot.slane %v416, %v420
        %v423 = vadd.f32 %v384, %v421
        %v424 = vadd.f32 %v385, %v421
        %v425 = vadd.f32 %v386, %v421
        %v426 = vadd.f32 %v387, %v421
        %v427 = vadd.f32 %v388, %v421
        %v428 = vadd.f32 %v389, %v421
        %v429 = vadd.f32 %v390, %v421
        %v430 = vadd.f32 %v391, %v421
        %v431 = vadd.f32 %v392, %v421
        %v432 = vadd.f32 %v393, %v421
        %v433 = vadd.f32 %v394, %v421
        %v434 = vadd.f32 %v395, %v421
        %v435 = vadd.f32 %v396, %v421
        %v436 = vadd.f32 %v397, %v421
        %v437 = vadd.f32 %v398, %v421
        %v438 = vadd.f32 %v399, %v421
        %v439 = vadd.f32 %v400, %v421
        %v440 = vadd.f32 %v401, %v421
        %v441 = vadd.f32 %v402, %v421
        %v442 = vadd.f32 %v403, %v421
        %v443 = vadd.f32 %v404, %v421
        %v444 = vadd.f32 %v405, %v421
        %v445 = vadd.f32 %v406, %v421
        %v446 = vadd.f32 %v407, %v421
        %v447 = vadd.f32 %v408, %v421
        %v448 = vadd.f32 %v409, %v421
        %v449 = vadd.f32 %v410, %v421
        %v450 = vadd.f32 %v411, %v421
        %v451 = vadd.f32 %v412, %v421
        %v452 = vadd.f32 %v413, %v421
        %v453 = vadd.f32 %v414, %v421
        %v454 = vadd.f32 %v415, %v421
        %v455 = vmax.f32 %v423, 0.0
        %v456 = vmax.f32 %v424, 0.0
        %v457 = vmax.f32 %v425, 0.0
        %v458 = vmax.f32 %v426, 0.0
        %v459 = vmax.f32 %v427, 0.0
        %v460 = vmax.f32 %v428, 0.0
        %v461 = vmax.f32 %v429, 0.0
        %v462 = vmax.f32 %v430, 0.0
        %v463 = vmax.f32 %v431, 0.0
        %v464 = vmax.f32 %v432, 0.0
        %v465 = vmax.f32 %v433, 0.0
        %v466 = vmax.f32 %v434, 0.0
        %v467 = vmax.f32 %v435, 0.0
        %v468 = vmax.f32 %v436, 0.0
        %v469 = vmax.f32 %v437, 0.0
        %v470 = vmax.f32 %v438, 0.0
        %v471 = vmax.f32 %v439, 0.0
        %v472 = vmax.f32 %v440, 0.0
        %v473 = vmax.f32 %v441, 0.0
        %v474 = vmax.f32 %v442, 0.0
        %v475 = vmax.f32 %v443, 0.0
        %v476 = vmax.f32 %v444, 0.0
        %v477 = vmax.f32 %v445, 0.0
        %v478 = vmax.f32 %v446, 0.0
        %v479 = vmax.f32 %v447, 0.0
        %v480 = vmax.f32 %v448, 0.0
        %v481 = vmax.f32 %v449, 0.0
        %v482 = vmax.f32 %v450, 0.0
        %v483 = vmax.f32 %v451, 0.0
        %v484 = vmax.f32 %v452, 0.0
        %v485 = vmax.f32 %v453, 0.0
        %v486 = vmax.f32 %v454, 0.0
        %487 = vst [vmem:[%s342] sm:$0xff] %v455
        %488 = vst [vmem:[%s342 + $0x8] sm:$0xff] %v456
        %489 = vst [vmem:[%s342 + $0x10] sm:$0xff] %v457
        %490 = vst [vmem:[%s342 + $0x18] sm:$0xff] %v458
        %491 = vst [vmem:[%s342 + $0x20] sm:$0xff] %v459
        %492 = vst [vmem:[%s342 + $0x28] sm:$0xff] %v460
        %493 = vst [vmem:[%s342 + $0x30] sm:$0xff] %v461
        %494 = vst [vmem:[%s342 + $0x38] sm:$0xff] %v462
        %495 = vst [vmem:[%s342 + $0x40] sm:$0xff] %v463
        %496 = vst [vmem:[%s342 + $0x48] sm:$0xff] %v464
        %497 = vst [vmem:[%s342 + $0x50] sm:$0xff] %v465
        %498 = vst [vmem:[%s342 + $0x58] sm:$0xff] %v466
        %499 = vst [vmem:[%s342 + $0x60] sm:$0xff] %v467
        %500 = vst [vmem:[%s342 + $0x68] sm:$0xff] %v468
        %501 = vst [vmem:[%s342 + $0x70] sm:$0xff] %v469
        %502 = vst [vmem:[%s342 + $0x78] sm:$0xff] %v470
        %503 = vst [vmem:[%s342 + $0x80] sm:$0xff] %v471
        %504 = vst [vmem:[%s342 + $0x88] sm:$0xff] %v472
        %505 = vst [vmem:[%s342 + $0x90] sm:$0xff] %v473
        %506 = vst [vmem:[%s342 + $0x98] sm:$0xff] %v474
        %507 = vst [vmem:[%s342 + $0xa0] sm:$0xff] %v475
        %508 = vst [vmem:[%s342 + $0xa8] sm:$0xff] %v476
        %509 = vst [vmem:[%s342 + $0xb0] sm:$0xff] %v477
        %510 = vst [vmem:[%s342 + $0xb8] sm:$0xff] %v478
        %511 = vst [vmem:[%s342 + $0xc0] sm:$0xff] %v479
        %512 = vst [vmem:[%s342 + $0xc8] sm:$0xff] %v480
        %513 = vst [vmem:[%s342 + $0xd0] sm:$0xff] %v481
        %514 = vst [vmem:[%s342 + $0xd8] sm:$0xff] %v482
        %515 = vst [vmem:[%s342 + $0xe0] sm:$0xff] %v483
        %516 = vst [vmem:[%s342 + $0xe8] sm:$0xff] %v484
        %517 = vst [vmem:[%s342 + $0xf0] sm:$0xff] %v485
        %518 = vst [vmem:[%s342 + $0xf8] sm:$0xff] %v486
        %s519 = sand.u32 %s106, 1
        %s520 = sand.u32 %s106, 1
        %s521 = smul.addr %s520, 256
        %s522 = scalar_lea.vmem [#allocation3], %s521
        // Predicated region
        $region71: #{unet_up_conv_block.3} parent=65 // pred_check
          %p523 = pneg %p116
        $region72: #{unet_up_conv_block.3} parent=65 // pred_check_branch
          %525 = sbr.rel (%p523) target = $region74
        $region73: #{unet_up_conv_block.3} parent=65 // pred_region
          %s526 = smul.u32 8, %s19
          %s527 = smul.addr %s18, 128
          %s528 = sadd.s32 %s526, %s527
          %s529 = smul.addr %s528, 8
          %s530 = scalar_lea.vmem %s3, %s529
          // Predicated region
          $region75: #{unet_up_conv_block.3} parent=73 // pred_check
            _
          $region76: #{unet_up_conv_block.3} parent=73 // pred_check_branch
            %532 = sbr.rel (0) target = $region78
          $region77: #{unet_up_conv_block.3} parent=73 // pred_region
            // Predicated region
            $region79: #{unet_up_conv_block.3} parent=77 // pred_check
              _
            $region80: #{unet_up_conv_block.3} parent=77 // pred_check_branch
              %534 = sbr.rel (0) target = $region82
            $region81: #{unet_up_conv_block.3} parent=77 // pred_region
              // Predicated region
              $region94: #{unet_up_conv_block.3} parent=81 // pred_check
                _
              $region95: #{unet_up_conv_block.3} parent=81 // pred_check_branch
                %612 = sbr.rel (0) target = $region97
              $region96: #{unet_up_conv_block.3} parent=81 // pred_region
                loop: start=0, step=1, limit=1
                $region98: #{unet_up_conv_block.3} parent=96 // loop_pre_header
                  _
                $region99: #{unet_up_conv_block.3} parent=96 // loop_header
                  %s614 = sphi 0, %s618
                  %p615 = scmp.ge.s32.totalorder %s614, 1
                  %s619 = sphi %s522, %s522
                  %s620 = sphi %s530, %s530
                $region100: #{unet_up_conv_block.3} parent=96 // loop_header_branch
                  %617 = sbr.rel (%p615) target = $region104
                $region101: #{unet_up_conv_block.3} parent=96 // loop_body
                  %v621 = vld [vmem:[%s619] sm:$0xff]
                  %622 = vst [vmem:[%s620] sm:$0xff] %v621
                  %v623 = vld [vmem:[%s619 + $0x8] sm:$0xff]
                  %624 = vst [vmem:[%s620 + $0x8] sm:$0xff] %v623
                  %v625 = vld [vmem:[%s619 + $0x10] sm:$0xff]
                  %626 = vst [vmem:[%s620 + $0x10] sm:$0xff] %v625
                  %v627 = vld [vmem:[%s619 + $0x18] sm:$0xff]
                  %628 = vst [vmem:[%s620 + $0x18] sm:$0xff] %v627
                  %v629 = vld [vmem:[%s619 + $0x20] sm:$0xff]
                  %630 = vst [vmem:[%s620 + $0x20] sm:$0xff] %v629
                  %v631 = vld [vmem:[%s619 + $0x28] sm:$0xff]
                  %632 = vst [vmem:[%s620 + $0x28] sm:$0xff] %v631
                  %v633 = vld [vmem:[%s619 + $0x30] sm:$0xff]
                  %634 = vst [vmem:[%s620 + $0x30] sm:$0xff] %v633
                  %v635 = vld [vmem:[%s619 + $0x38] sm:$0xff]
                  %636 = vst [vmem:[%s620 + $0x38] sm:$0xff] %v635
                  %v637 = vld [vmem:[%s619 + $0x40] sm:$0xff]
                  %638 = vst [vmem:[%s620 + $0x100] sm:$0xff] %v637
                  %v639 = vld [vmem:[%s619 + $0x48] sm:$0xff]
                  %640 = vst [vmem:[%s620 + $0x108] sm:$0xff] %v639
                  %v641 = vld [vmem:[%s619 + $0x50] sm:$0xff]
                  %642 = vst [vmem:[%s620 + $0x110] sm:$0xff] %v641
                  %v643 = vld [vmem:[%s619 + $0x58] sm:$0xff]
                  %644 = vst [vmem:[%s620 + $0x118] sm:$0xff] %v643
                  %v645 = vld [vmem:[%s619 + $0x60] sm:$0xff]
                  %646 = vst [vmem:[%s620 + $0x120] sm:$0xff] %v645
                  %v647 = vld [vmem:[%s619 + $0x68] sm:$0xff]
                  %648 = vst [vmem:[%s620 + $0x128] sm:$0xff] %v647
                  %v649 = vld [vmem:[%s619 + $0x70] sm:$0xff]
                  %650 = vst [vmem:[%s620 + $0x130] sm:$0xff] %v649
                  %v651 = vld [vmem:[%s619 + $0x78] sm:$0xff]
                  %652 = vst [vmem:[%s620 + $0x138] sm:$0xff] %v651
                  %v653 = vld [vmem:[%s619 + $0x80] sm:$0xff]
                  %654 = vst [vmem:[%s620 + $0x200] sm:$0xff] %v653
                  %v655 = vld [vmem:[%s619 + $0x88] sm:$0xff]
                  %656 = vst [vmem:[%s620 + $0x208] sm:$0xff] %v655
                  %v657 = vld [vmem:[%s619 + $0x90] sm:$0xff]
                  %658 = vst [vmem:[%s620 + $0x210] sm:$0xff] %v657
                  %v659 = vld [vmem:[%s619 + $0x98] sm:$0xff]
                  %660 = vst [vmem:[%s620 + $0x218] sm:$0xff] %v659
                  %v661 = vld [vmem:[%s619 + $0xa0] sm:$0xff]
                  %662 = vst [vmem:[%s620 + $0x220] sm:$0xff] %v661
                  %v663 = vld [vmem:[%s619 + $0xa8] sm:$0xff]
                  %664 = vst [vmem:[%s620 + $0x228] sm:$0xff] %v663
                  %v665 = vld [vmem:[%s619 + $0xb0] sm:$0xff]
                  %666 = vst [vmem:[%s620 + $0x230] sm:$0xff] %v665
                  %v667 = vld [vmem:[%s619 + $0xb8] sm:$0xff]
                  %668 = vst [vmem:[%s620 + $0x238] sm:$0xff] %v667
                  %v669 = vld [vmem:[%s619 + $0xc0] sm:$0xff]
                  %670 = vst [vmem:[%s620 + $0x300] sm:$0xff] %v669
                  %v671 = vld [vmem:[%s619 + $0xc8] sm:$0xff]
                  %672 = vst [vmem:[%s620 + $0x308] sm:$0xff] %v671
                  %v673 = vld [vmem:[%s619 + $0xd0] sm:$0xff]
                  %674 = vst [vmem:[%s620 + $0x310] sm:$0xff] %v673
                  %v675 = vld [vmem:[%s619 + $0xd8] sm:$0xff]
                  %676 = vst [vmem:[%s620 + $0x318] sm:$0xff] %v675
                  %v677 = vld [vmem:[%s619 + $0xe0] sm:$0xff]
                  %678 = vst [vmem:[%s620 + $0x320] sm:$0xff] %v677
                  %v679 = vld [vmem:[%s619 + $0xe8] sm:$0xff]
                  %680 = vst [vmem:[%s620 + $0x328] sm:$0xff] %v679
                  %v681 = vld [vmem:[%s619 + $0xf0] sm:$0xff]
                  %682 = vst [vmem:[%s620 + $0x330] sm:$0xff] %v681
                  %v683 = vld [vmem:[%s619 + $0xf8] sm:$0xff]
                  %684 = vst [vmem:[%s620 + $0x338] sm:$0xff] %v683
                $region102: #{unet_up_conv_block.3} parent=96 // loop_footer
                  %s618 = sadd.s32 1, %s614
                $region103: #{unet_up_conv_block.3} parent=96 // loop_footer_branch
                  %613 = sbr.rel target = $region99
                $region104: #{unet_up_conv_block.3} parent=96 // loop_exit
                  _
              $region97: #{unet_up_conv_block.3} parent=81 // pred_fallthru
                _
              // Predicated region
              $region105: #{unet_up_conv_block.3} parent=81 // pred_check
                _
              $region106: #{unet_up_conv_block.3} parent=81 // pred_check_branch
                %686 = sbr.rel target = $region108
              $region107: #{unet_up_conv_block.3} parent=81 // pred_region
                _
              $region108: #{unet_up_conv_block.3} parent=81 // pred_fallthru
                _
            $region82: #{unet_up_conv_block.3} parent=77 // pred_fallthru
              _
            // Predicated region
            $region83: #{unet_up_conv_block.3} parent=77 // pred_check
              _
            $region84: #{unet_up_conv_block.3} parent=77 // pred_check_branch
              %536 = sbr.rel target = $region86
            $region85: #{unet_up_conv_block.3} parent=77 // pred_region
              %s538 = ssub.s32 256, 1
              loop: start=0, step=1, limit=1
              $region87: #{unet_up_conv_block.3} parent=85 // loop_pre_header
                _
              $region88: #{unet_up_conv_block.3} parent=85 // loop_header
                %s540 = sphi 0, %s544
                %p541 = scmp.ge.s32.totalorder %s540, 1
                %s545 = sphi %s522, %s522
                %s546 = sphi %s530, %s530
              $region89: #{unet_up_conv_block.3} parent=85 // loop_header_branch
                %543 = sbr.rel (%p541) target = $region93
              $region90: #{unet_up_conv_block.3} parent=85 // loop_body
                %v547 = vld [vmem:[%s545] sm:%s538]
                %548 = vst [vmem:[%s546] sm:%s538] %v547
                %v549 = vld [vmem:[%s545 + $0x8] sm:%s538]
                %550 = vst [vmem:[%s546 + $0x8] sm:%s538] %v549
                %v551 = vld [vmem:[%s545 + $0x10] sm:%s538]
                %552 = vst [vmem:[%s546 + $0x10] sm:%s538] %v551
                %v553 = vld [vmem:[%s545 + $0x18] sm:%s538]
                %554 = vst [vmem:[%s546 + $0x18] sm:%s538] %v553
                %v555 = vld [vmem:[%s545 + $0x20] sm:%s538]
                %556 = vst [vmem:[%s546 + $0x20] sm:%s538] %v555
                %v557 = vld [vmem:[%s545 + $0x28] sm:%s538]
                %558 = vst [vmem:[%s546 + $0x28] sm:%s538] %v557
                %v559 = vld [vmem:[%s545 + $0x30] sm:%s538]
                %560 = vst [vmem:[%s546 + $0x30] sm:%s538] %v559
                %v561 = vld [vmem:[%s545 + $0x38] sm:%s538]
                %562 = vst [vmem:[%s546 + $0x38] sm:%s538] %v561
                %v563 = vld [vmem:[%s545 + $0x40] sm:%s538]
                %564 = vst [vmem:[%s546 + $0x100] sm:%s538] %v563
                %v565 = vld [vmem:[%s545 + $0x48] sm:%s538]
                %566 = vst [vmem:[%s546 + $0x108] sm:%s538] %v565
                %v567 = vld [vmem:[%s545 + $0x50] sm:%s538]
                %568 = vst [vmem:[%s546 + $0x110] sm:%s538] %v567
                %v569 = vld [vmem:[%s545 + $0x58] sm:%s538]
                %570 = vst [vmem:[%s546 + $0x118] sm:%s538] %v569
                %v571 = vld [vmem:[%s545 + $0x60] sm:%s538]
                %572 = vst [vmem:[%s546 + $0x120] sm:%s538] %v571
                %v573 = vld [vmem:[%s545 + $0x68] sm:%s538]
                %574 = vst [vmem:[%s546 + $0x128] sm:%s538] %v573
                %v575 = vld [vmem:[%s545 + $0x70] sm:%s538]
                %576 = vst [vmem:[%s546 + $0x130] sm:%s538] %v575
                %v577 = vld [vmem:[%s545 + $0x78] sm:%s538]
                %578 = vst [vmem:[%s546 + $0x138] sm:%s538] %v577
                %v579 = vld [vmem:[%s545 + $0x80] sm:%s538]
                %580 = vst [vmem:[%s546 + $0x200] sm:%s538] %v579
                %v581 = vld [vmem:[%s545 + $0x88] sm:%s538]
                %582 = vst [vmem:[%s546 + $0x208] sm:%s538] %v581
                %v583 = vld [vmem:[%s545 + $0x90] sm:%s538]
                %584 = vst [vmem:[%s546 + $0x210] sm:%s538] %v583
                %v585 = vld [vmem:[%s545 + $0x98] sm:%s538]
                %586 = vst [vmem:[%s546 + $0x218] sm:%s538] %v585
                %v587 = vld [vmem:[%s545 + $0xa0] sm:%s538]
                %588 = vst [vmem:[%s546 + $0x220] sm:%s538] %v587
                %v589 = vld [vmem:[%s545 + $0xa8] sm:%s538]
                %590 = vst [vmem:[%s546 + $0x228] sm:%s538] %v589
                %v591 = vld [vmem:[%s545 + $0xb0] sm:%s538]
                %592 = vst [vmem:[%s546 + $0x230] sm:%s538] %v591
                %v593 = vld [vmem:[%s545 + $0xb8] sm:%s538]
                %594 = vst [vmem:[%s546 + $0x238] sm:%s538] %v593
                %v595 = vld [vmem:[%s545 + $0xc0] sm:%s538]
                %596 = vst [vmem:[%s546 + $0x300] sm:%s538] %v595
                %v597 = vld [vmem:[%s545 + $0xc8] sm:%s538]
                %598 = vst [vmem:[%s546 + $0x308] sm:%s538] %v597
                %v599 = vld [vmem:[%s545 + $0xd0] sm:%s538]
                %600 = vst [vmem:[%s546 + $0x310] sm:%s538] %v599
                %v601 = vld [vmem:[%s545 + $0xd8] sm:%s538]
                %602 = vst [vmem:[%s546 + $0x318] sm:%s538] %v601
                %v603 = vld [vmem:[%s545 + $0xe0] sm:%s538]
                %604 = vst [vmem:[%s546 + $0x320] sm:%s538] %v603
                %v605 = vld [vmem:[%s545 + $0xe8] sm:%s538]
                %606 = vst [vmem:[%s546 + $0x328] sm:%s538] %v605
                %v607 = vld [vmem:[%s545 + $0xf0] sm:%s538]
                %608 = vst [vmem:[%s546 + $0x330] sm:%s538] %v607
                %v609 = vld [vmem:[%s545 + $0xf8] sm:%s538]
                %610 = vst [vmem:[%s546 + $0x338] sm:%s538] %v609
              $region91: #{unet_up_conv_block.3} parent=85 // loop_footer
                %s544 = sadd.s32 1, %s540
              $region92: #{unet_up_conv_block.3} parent=85 // loop_footer_branch
                %539 = sbr.rel target = $region88
              $region93: #{unet_up_conv_block.3} parent=85 // loop_exit
                _
            $region86: #{unet_up_conv_block.3} parent=77 // pred_fallthru
              _
          $region78: #{unet_up_conv_block.3} parent=73 // pred_fallthru
            _
          %687 = vnop
        $region74: #{unet_up_conv_block.3} parent=65 // pred_fallthru
          _
      $region66: #{unet_up_conv_block.3} parent=5 // pred_fallthru
        _
      %p688 = scmp.le.s32.totalorder 2, %s9
      // Predicated region
      $region109: #{unet_up_conv_block.3} parent=5 // pred_check
        %p689 = pneg %p688
      $region110: #{unet_up_conv_block.3} parent=5 // pred_check_branch
        %691 = sbr.rel (%p689) target = $region112
      $region111: #{unet_up_conv_block.3} parent=5 // pred_region
        %s692 = ssub.s32 %s9, 2
        // Predicated region
        $region113: #{unet_up_conv_block.3} parent=111 // pred_check
          %p693 = pneg %p122
        $region114: #{unet_up_conv_block.3} parent=111 // pred_check_branch
          %695 = sbr.rel (%p693) target = $region116
        $region115: #{unet_up_conv_block.3} parent=111 // pred_region
          %s696 = sand.u32 %s107, 1
          %s697 = sand.u32 %s107, 1
          %s698 = smul.addr %s697, 256
          %s699 = scalar_lea.vmem [#allocation3], %s698
        $region116: #{unet_up_conv_block.3} parent=111 // pred_fallthru
          _
      $region112: #{unet_up_conv_block.3} parent=5 // pred_fallthru
        _
    $region6: #{unet_up_conv_block.3} parent=1 // loop_footer
      %s13 = sadd.s32 1, %s9
    $region7: #{unet_up_conv_block.3} parent=1 // loop_footer_branch
      %8 = sbr.rel target = $region3
    $region8: #{unet_up_conv_block.3} parent=1 // loop_exit
      _

// kernel: unet_up_conv_block.2
$region0: #{unet_up_conv_block.2}
  #allocation0 [shape = 'u32[]', space=smem, size = 0x4, offset = 0x4, fixed_abs, tag = 'smem constant byte address 0x4 - core index']
  #allocation1 [shape = 'u32[144,128]{1,0:T(1,128)}', space=vmem, size = 0x12000, scoped, tag = 'internal scratch']
  %s0 = inlined_call_operand.vmem [shape: bf16[2,18,18,4], index: 0, kind: input, shape index: {}]
  %s1 = inlined_call_operand.vmem [shape: bf16[4,16,128], index: 1, kind: input, shape index: {}]
  %s2 = inlined_call_operand.vmem [shape: f32[1,128], index: 2, kind: input, shape index: {}]
  %s3 = inlined_call_operand.vmem [shape: f32[2,4,256,128], index: 3, kind: output, shape index: {0}]
  %s4 = inlined_call_operand.vmem [shape: f32[2,4,2,128], index: 4, kind: output, shape index: {1}]
  %5 = xla_tuple %s3, %s4
  %s6 = sld [smem:[#allocation0]]
  $region87: #{unet_up_conv_block.2} parent=0
    _
  %s8 = ssub.s32 1, %s6
  %s9 = scalar_select 0, %s8, %s6
  $region1: #{unet_up_conv_block.2} parent=0
    #allocation2 [shape = 'u8[262144]{0}', space=vmem, size = 0x40000, scoped, tag = 'output window, operand 0']
    loop: start=0, step=1, limit=10
    $region2: #{unet_up_conv_block.2} parent=1 // loop_pre_header
      _
    $region3: #{unet_up_conv_block.2} parent=1 // loop_header
      %s11 = sphi 0, %s15
      %p12 = scmp.ge.s32.totalorder %s11, 10
      %s18 = sphi 0, %s30
      %s19 = sphi 0, %s26
      %s20 = sphi 0, %s18
      %s21 = sphi 0, %s19
      %s22 = sphi 0, %s20
      %s23 = sphi 0, %s21
      %s33 = sphi 0, %s35
      %s36 = sphi 0, %s33
      %s37 = sphi 0, %s36
      %s53 = sphi 0, %s37
      %s57 = sphi 0, %s57
      %s59 = sphi 0, %s57
      %s60 = sphi 0, %s59
      %s74 = sphi 0, %s60
      %s78 = sphi 0, %s78
      %s80 = sphi 0, %s78
      %s81 = sphi 0, %s80
      %s95 = sphi 0, %s81
      %s103 = sphi 0, %s105
      %s106 = sphi 0, %s103
      %s107 = sphi 0, %s106
      %s123 = sphi 0, %s107
      %s131 = sphi 0, %s133
      %s134 = sphi 0, %s131
      %s135 = sphi 0, %s134
      %s151 = sphi 0, %s135
    $region4: #{unet_up_conv_block.2} parent=1 // loop_header_branch
      %14 = sbr.rel (%p12) target = $region8
    $region5: #{unet_up_conv_block.2} parent=1 // loop_body
      %s16 = ssub.s32 %s11, 1
      %s17 = ssub.s32 %s11, 2
      %s24 = sadd.s32 1, %s19
      %p25 = scmp.ge.s32.totalorder %s24, 4
      %s26 = scalar_select %p25, 0, %s24
      %s27 = sadd.s32 1, %s18
      %s28 = scalar_select %p25, %s27, %s18
      %p29 = scmp.ge.s32.totalorder %s28, 2
      %s30 = scalar_select %p29, 0, %s28
      %s31 = ssub.s32 %s18, %s30
      %p32 = scmp.eq.s32.totalorder %s31, 0
      %s34 = sadd.s32 %s33, 1
      %s35 = scalar_select %p32, %s33, %s34
      %p38 = pneg %p32
      %p39 = scmp.eq.s32.totalorder %s11, 7
      %p40 = por %p38, %p39
      %p41 = scmp.ne.s32.totalorder %s33, %s36
      %p42 = scmp.eq.s32.totalorder %s11, 0
      %p43 = por %p41, %p42
      %p44 = scmp.ne.s32.totalorder %s33, %s36
      %p45 = scmp.eq.s32.totalorder %s16, 7
      %p46 = por %p44, %p45
      %p47 = scmp.ne.s32.totalorder %s36, %s37
      %p48 = scmp.eq.s32.totalorder %s16, 0
      %p49 = por %p47, %p48
      %p50 = scmp.ne.s32.totalorder %s36, %s37
      %p51 = scmp.eq.s32.totalorder %s17, 7
      %p52 = por %p50, %p51
      %p54 = scmp.ne.s32.totalorder %s37, %s53
      %p55 = scmp.eq.s32.totalorder %s17, 0
      %p56 = por %p54, %p55
      %s58 = sadd.s32 %s57, 1
      %p61 = scmp.eq.s32.totalorder %s11, 7
      %p62 = scmp.ne.s32.totalorder %s57, %s59
      %p63 = scmp.eq.s32.totalorder %s11, 0
      %p64 = por %p62, %p63
      %p65 = scmp.ne.s32.totalorder %s57, %s59
      %p66 = scmp.eq.s32.totalorder %s16, 7
      %p67 = por %p65, %p66
      %p68 = scmp.ne.s32.totalorder %s59, %s60
      %p69 = scmp.eq.s32.totalorder %s16, 0
      %p70 = por %p68, %p69
      %p71 = scmp.ne.s32.totalorder %s59, %s60
      %p72 = scmp.eq.s32.totalorder %s17, 7
      %p73 = por %p71, %p72
      %p75 = scmp.ne.s32.totalorder %s60, %s74
      %p76 = scmp.eq.s32.totalorder %s17, 0
      %p77 = por %p75, %p76
      %s79 = sadd.s32 %s78, 1
      %p82 = scmp.eq.s32.totalorder %s11, 7
      %p83 = scmp.ne.s32.totalorder %s78, %s80
      %p84 = scmp.eq.s32.totalorder %s11, 0
      %p85 = por %p83, %p84
      %p86 = scmp.ne.s32.totalorder %s78, %s80
      %p87 = scmp.eq.s32.totalorder %s16, 7
      %p88 = por %p86, %p87
      %p89 = scmp.ne.s32.totalorder %s80, %s81
      %p90 = scmp.eq.s32.totalorder %s16, 0
      %p91 = por %p89, %p90
      %p92 = scmp.ne.s32.totalorder %s80, %s81
      %p93 = scmp.eq.s32.totalorder %s17, 7
      %p94 = por %p92, %p93
      %p96 = scmp.ne.s32.totalorder %s81, %s95
      %p97 = scmp.eq.s32.totalorder %s17, 0
      %p98 = por %p96, %p97
      %s99 = ssub.s32 %s18, %s30
      %s100 = ssub.s32 %s19, %s26
      %s101 = sor.u32 %s99, %s100
      %p102 = scmp.eq.s32.totalorder %s101, 0
      %s104 = sadd.s32 %s103, 1
      %s105 = scalar_select %p102, %s103, %s104
      %p108 = pneg %p102
      %p109 = scmp.eq.s32.totalorder %s11, 7
      %p110 = por %p108, %p109
      %p111 = scmp.ne.s32.totalorder %s103, %s106
      %p112 = scmp.eq.s32.totalorder %s11, 0
      %p113 = por %p111, %p112
      %p114 = scmp.ne.s32.totalorder %s103, %s106
      %p115 = scmp.eq.s32.totalorder %s16, 7
      %p116 = por %p114, %p115
      %p117 = scmp.ne.s32.totalorder %s106, %s107
      %p118 = scmp.eq.s32.totalorder %s16, 0
      %p119 = por %p117, %p118
      %p120 = scmp.ne.s32.totalorder %s106, %s107
      %p121 = scmp.eq.s32.totalorder %s17, 7
      %p122 = por %p120, %p121
      %p124 = scmp.ne.s32.totalorder %s107, %s123
      %p125 = scmp.eq.s32.totalorder %s17, 0
      %p126 = por %p124, %p125
      %s127 = ssub.s32 %s18, %s30
      %s128 = ssub.s32 %s19, %s26
      %s129 = sor.u32 %s127, %s128
      %p130 = scmp.eq.s32.totalorder %s129, 0
      %s132 = sadd.s32 %s131, 1
      %s133 = scalar_select %p130, %s131, %s132
      %p136 = pneg %p130
      %p137 = scmp.eq.s32.totalorder %s11, 7
      %p138 = por %p136, %p137
      %p139 = scmp.ne.s32.totalorder %s131, %s134
      %p140 = scmp.eq.s32.totalorder %s11, 0
      %p141 = por %p139, %p140
      %p142 = scmp.ne.s32.totalorder %s131, %s134
      %p143 = scmp.eq.s32.totalorder %s16, 7
      %p144 = por %p142, %p143
      %p145 = scmp.ne.s32.totalorder %s134, %s135
      %p146 = scmp.eq.s32.totalorder %s16, 0
      %p147 = por %p145, %p146
      %p148 = scmp.ne.s32.totalorder %s134, %s135
      %p149 = scmp.eq.s32.totalorder %s17, 7
      %p150 = por %p148, %p149
      %p152 = scmp.ne.s32.totalorder %s135, %s151
      %p153 = scmp.eq.s32.totalorder %s17, 0
      %p154 = por %p152, %p153
      %p155 = scmp.le.s32.totalorder 1, %s11
      %p156 = scmp.lt.s32.totalorder %s11, 9
      %p157 = pnand %p155, %p156
      %p158 = pneg %p157
      // Predicated region
      $region9: #{unet_up_conv_block.2} parent=5 // pred_check
        _
      $region10: #{unet_up_conv_block.2} parent=5 // pred_check_branch
        %160 = sbr.rel (%p157) target = $region12
      $region11: #{unet_up_conv_block.2} parent=5 // pred_region
        %s161 = ssub.s32 %s11, 1
        // Predicated region
        $region13: #{unet_up_conv_block.2} parent=11 // pred_check
          %p162 = pneg %p70
        $region14: #{unet_up_conv_block.2} parent=11 // pred_check_branch
          %164 = sbr.rel (%p162) target = $region16
        $region15: #{unet_up_conv_block.2} parent=11 // pred_region
          _
        $region16: #{unet_up_conv_block.2} parent=11 // pred_fallthru
          _
        // Predicated region
        $region17: #{unet_up_conv_block.2} parent=11 // pred_check
          %p165 = pneg %p91
        $region18: #{unet_up_conv_block.2} parent=11 // pred_check_branch
          %167 = sbr.rel (%p165) target = $region20
        $region19: #{unet_up_conv_block.2} parent=11 // pred_region
          _
        $region20: #{unet_up_conv_block.2} parent=11 // pred_fallthru
          _
      $region12: #{unet_up_conv_block.2} parent=5 // pred_fallthru
        _
      %p168 = scmp.lt.s32.totalorder %s11, 8
      // Predicated region
      $region21: #{unet_up_conv_block.2} parent=5 // pred_check
        %p169 = pneg %p168
      $region22: #{unet_up_conv_block.2} parent=5 // pred_check_branch
        %171 = sbr.rel (%p169) target = $region24
      $region23: #{unet_up_conv_block.2} parent=5 // pred_region
        // Predicated region
        $region25: #{unet_up_conv_block.2} parent=23 // pred_check
          %p172 = pneg %p43
        $region26: #{unet_up_conv_block.2} parent=23 // pred_check_branch
          %174 = sbr.rel (%p172) target = $region28
        $region27: #{unet_up_conv_block.2} parent=23 // pred_region
          %p175 = scmp.lt.s32.totalorder %s18, 1
          %s176 = scalar_select %p175, %s18, 1
          %s177 = smul.addr %s176, 54
          %s178 = smul.addr %s177, 4
          %s179 = scalar_lea.vmem %s0, %s178
        $region28: #{unet_up_conv_block.2} parent=23 // pred_fallthru
          _
      $region24: #{unet_up_conv_block.2} parent=5 // pred_fallthru
        _
      %p180 = scmp.le.s32.totalorder 1, %s11
      %p181 = scmp.lt.s32.totalorder %s11, 9
      %p182 = pnand %p180, %p181
      %p183 = pneg %p182
      // Predicated region
      $region29: #{unet_up_conv_block.2} parent=5 // pred_check
        _
      $region30: #{unet_up_conv_block.2} parent=5 // pred_check_branch
        %185 = sbr.rel (%p182) target = $region32
      $region31: #{unet_up_conv_block.2} parent=5 // pred_region
        %s186 = ssub.s32 %s11, 1
        %p187 = scmp.lt.s32.totalorder %s20, 1
        %s188 = scalar_select %p187, %s20, 1
        %s189 = smul.addr %s188, 54
        %s190 = smul.addr %s189, 4
        %s191 = scalar_lea.vmem %s0, %s190
        %p192 = pneg %p49
        %p193 = pneg %p46
        %p194 = pneg %p70
        %p195 = pneg %p67
        %p196 = pneg %p91
        %p197 = pneg %p88
        %p198 = pneg %p119
        %p199 = pneg %p116
        %s200 = sand.u32 %s106, 1
        %s201 = sand.u32 %s106, 1
        %s202 = smul.addr %s201, 256
        %s203 = scalar_lea.vmem [#allocation2], %s202
        %p204 = pneg %p147
        %p205 = pneg %p144
        %p206 = scmp.lt.s32.totalorder %s20, 1
        %s207 = scalar_select %p206, %s20, 1
        %p208 = scmp.lt.s32.totalorder %s21, 3
        %s209 = scalar_select %p208, %s21, 3
        %s210 = smul.addr %s207, 4
        %s211 = sadd.s32 %s209, %s210
        %s212 = smul.addr %s211, 2
        %s213 = scalar_lea.vmem %s4, %s212
        %p214 = scmp.lt.s32.totalorder %s20, 1
        %s215 = scalar_select %p214, %s20, 1
        %s216 = smul.addr %s215, 54
        %s217 = smul.addr %s216, 4
        %s218 = scalar_lea.vmem %s0, %s217
        %s219 = smul.u32 8, %s21
        %p220 = scmp.lt.s32.totalorder %s20, 1
        %s221 = scalar_select %p220, %s20, 1
        %p222 = scmp.lt.s32.totalorder %s21, 3
        %s223 = scalar_select %p222, %s21, 3
        %s224 = smul.addr %s221, 4
        %s225 = sadd.s32 %s223, %s224
        %s226 = smul.addr %s225, 2
        %s227 = scalar_lea.vmem %s4, %s226
        %s229 = smul.u32 %s21, 4
        %s230 = smul.u32 %s229, 3
        %s231 = smul.addr %s230, 4
        %s232 = scalar_lea.vmem %s218, %s231
        %v233 = vld [vmem:[%s232] sm:$0xf]
        %v234 = vld [vmem:[%s232 + $0x4] sm:$0xf]
        %v235 = vld [vmem:[%s232 + $0x8] sm:$0x1]
        %v236 = vld [vmem:[%s232 + $0xc] sm:$0xf]
        %v237 = vld [vmem:[%s232 + $0x10] sm:$0xf]
        %v238 = vld [vmem:[%s232 + $0x14] sm:$0x1]
        %v239 = vld [vmem:[%s232 + $0x18] sm:$0xf]
        %v240 = vld [vmem:[%s232 + $0x1c] sm:$0xf]
        %v241 = vld [vmem:[%s232 + $0x20] sm:$0x1]
        %v242 = vld [vmem:[%s232 + $0x24] sm:$0xf]
        %v243 = vld [vmem:[%s232 + $0x28] sm:$0xf]
        %v244 = vld [vmem:[%s232 + $0x2c] sm:$0x1]
        %v245 = vld [vmem:[%s232 + $0x30] sm:$0xf]
        %v246 = vld [vmem:[%s232 + $0x34] sm:$0xf]
        %v247 = vld [vmem:[%s232 + $0x38] sm:$0x1]
        %v248 = vld [vmem:[%s232 + $0x3c] sm:$0xf]
        %v249 = vld [vmem:[%s232 + $0x40] sm:$0xf]
        %v250 = vld [vmem:[%s232 + $0x44] sm:$0x1]
        %v251 = vld [vmem:[%s2] sm:$0x1]
        %vm252 = vsmask.f32 3328
        %vm253 = vsmask.f32 7440
        %vm254 = vmor %vm252, %vm253
        %v256 = vshrl.u32 %v233, 16
        %v258 = vrot.slane %v256, 4
        %v259 = vshll.u32 %v233, 16
        %v261 = vrot.slane %v259, 5
        %v262 = vor.u32 %v258, %v261
        %v263 = vrot.slane %v262, 4
        %v265 = vshll.u32 %v234, 16
        %v267 = vrot.slane %v265, 5
        %v268 = vsel %vm254, %v263, %v267
        %v269 = vshrl.u32 %v234, 16
        %v271 = vrot.slane %v269, 4
        %v272 = vor.u32 %v271, %v267
        %v273 = vrot.slane %v272, 4
        %v275 = vshll.u32 %v235, 16
        %v277 = vrot.slane %v275, 5
        %v278 = vsel %vm254, %v273, %v277
        %v280 = vshrl.u32 %v236, 16
        %v282 = vrot.slane %v280, 4
        %v283 = vshll.u32 %v236, 16
        %v285 = vrot.slane %v283, 5
        %v286 = vor.u32 %v282, %v285
        %v287 = vrot.slane %v286, 4
        %v289 = vshll.u32 %v237, 16
        %v291 = vrot.slane %v289, 5
        %v292 = vsel %vm254, %v287, %v291
        %v293 = vshrl.u32 %v237, 16
        %v295 = vrot.slane %v293, 4
        %v296 = vor.u32 %v295, %v291
        %v297 = vrot.slane %v296, 4
        %v299 = vshll.u32 %v238, 16
        %v301 = vrot.slane %v299, 5
        %v302 = vsel %vm254, %v297, %v301
        %v304 = vshrl.u32 %v239, 16
        %v306 = vrot.slane %v304, 4
        %v307 = vshll.u32 %v239, 16
        %v309 = vrot.slane %v307, 5
        %v310 = vor.u32 %v306, %v309
        %v311 = vrot.slane %v310, 4
        %v313 = vshll.u32 %v240, 16
        %v315 = vrot.slane %v313, 5
        %v316 = vsel %vm254, %v311, %v315
        %v317 = vshrl.u32 %v240, 16
        %v319 = vrot.slane %v317, 4
        %v320 = vor.u32 %v319, %v315
        %v321 = vrot.slane %v320, 4
        %v323 = vshll.u32 %v241, 16
        %v325 = vrot.slane %v323, 5
        %v326 = vsel %vm254, %v321, %v325
        %v328 = vshrl.u32 %v242, 16
        %v330 = vrot.slane %v328, 4
        %v331 = vshll.u32 %v242, 16
        %v333 = vrot.slane %v331, 5
        %v334 = vor.u32 %v330, %v333
        %v335 = vrot.slane %v334, 4
        %v337 = vshll.u32 %v243, 16
        %v339 = vrot.slane %v337, 5
        %v340 = vsel %vm254, %v335, %v339
        %v341 = vshrl.u32 %v243, 16
        %v343 = vrot.slane %v341, 4
        %v344 = vor.u32 %v343, %v339
        %v345 = vrot.slane %v344, 4
        %v347 = vshll.u32 %v244, 16
        %v349 = vrot.slane %v347, 5
        %v350 = vsel %vm254, %v345, %v349
        %v352 = vshrl.u32 %v245, 16
        %v354 = vrot.slane %v352, 4
        %v355 = vshll.u32 %v245, 16
        %v357 = vrot.slane %v355, 5
        %v358 = vor.u32 %v354, %v357
        %v359 = vrot.slane %v358, 4
        %v361 = vshll.u32 %v246, 16
        %v363 = vrot.slane %v361, 5
        %v364 = vsel %vm254, %v359, %v363
        %v365 = vshrl.u32 %v246, 16
        %v367 = vrot.slane %v365, 4
        %v368 = vor.u32 %v367, %v363
        %v369 = vrot.slane %v368, 4
        %v371 = vshll.u32 %v247, 16
        %v373 = vrot.slane %v371, 5
        %v374 = vsel %vm254, %v369, %v373
        %v383 = vunpack.c.l.b16 %v233
        %v384 = vunpack.c.l.b16 %v234
        %v385 = vunpack.c.l.b16 %v236
        %v386 = vunpack.c.l.b16 %v237
        %v387 = vunpack.c.l.b16 %v239
        %v388 = vunpack.c.l.b16 %v240
        %v389 = vunpack.c.l.b16 %v242
        %v390 = vunpack.c.l.b16 %v243
        %v391 = vpack.c.b16 %v384, %v383
        %v392 = vpack.c.b16 %v386, %v385
        %v393 = vpack.c.b16 %v388, %v387
        %v394 = vpack.c.b16 %v390, %v389
        %v395 = vunpack.c.l.b16 %v268
        %v396 = vunpack.c.l.b16 %v278
        %v397 = vunpack.c.l.b16 %v292
        %v398 = vunpack.c.l.b16 %v302
        %v399 = vunpack.c.l.b16 %v316
        %v400 = vunpack.c.l.b16 %v326
        %v401 = vunpack.c.l.b16 %v340
        %v402 = vunpack.c.l.b16 %v350
        %v403 = vpack.c.b16 %v396, %v395
        %v404 = vpack.c.b16 %v398, %v397
        %v405 = vpack.c.b16 %v400, %v399
        %v406 = vpack.c.b16 %v402, %v401
        %407 = vrot.lane.b32.xlu0 %v403, 4
        %v408 = vpop.permute.xlu0 %407
        %409 = vrot.lane.b32.xlu0 %v404, 4
        %v410 = vpop.permute.xlu0 %409
        %411 = vrot.lane.b32.xlu0 %v405, 4
        %v412 = vpop.permute.xlu0 %411
        %413 = vrot.lane.b32.xlu0 %v406, 4
        %v414 = vpop.permute.xlu0 %413
        %v417 = vunpack.c.l.b16 %v245
        %v418 = vunpack.c.l.b16 %v246
        %v419 = vpack.c.b16 %v418, %v417
        %420 = vrot.lane.b32.xlu0 %v392, 8
        %v421 = vpop.permute.xlu0 %420
        %422 = vrot.lane.b32.xlu0 %v393, 8
        %v423 = vpop.permute.xlu0 %422
        %424 = vrot.lane.b32.xlu0 %v394, 8
        %v425 = vpop.permute.xlu0 %424
        %426 = vrot.lane.b32.xlu0 %v419, 8
        %v427 = vpop.permute.xlu0 %426
        %v428 = vunpack.c.l.b16 %v364
        %v429 = vunpack.c.l.b16 %v374
        %v430 = vpack.c.b16 %v429, %v428
        %431 = vrot.lane.b32.xlu0 %v404, 12
        %v432 = vpop.permute.xlu0 %431
        %433 = vrot.lane.b32.xlu0 %v405, 12
        %v434 = vpop.permute.xlu0 %433
        %435 = vrot.lane.b32.xlu0 %v406, 12
        %v436 = vpop.permute.xlu0 %435
        %437 = vrot.lane.b32.xlu0 %v430, 12
        %v438 = vpop.permute.xlu0 %437
        %vm439 = vcmask 31744
        %v442 = vsel %vm439, %v391, %v408
        %v445 = vsel %vm439, %v392, %v410
        %v448 = vsel %vm439, %v393, %v412
        %v451 = vsel %vm439, %v394, %v414
        %vm452 = vcmask 64512
        %v454 = vsel %vm452, %v442, %v421
        %v456 = vsel %vm452, %v445, %v423
        %v458 = vsel %vm452, %v448, %v425
        %v460 = vsel %vm452, %v451, %v427
        %vm461 = vcmask 97280
        %v463 = vsel %vm461, %v454, %v432
        %v465 = vsel %vm461, %v456, %v434
        %v467 = vsel %vm461, %v458, %v436
        %v469 = vsel %vm461, %v460, %v438
        %v470 = vld [vmem:[%s1] sm:$0xf]
        %v471 = vld [vmem:[%s1 + $0x4] sm:$0xf]
        %v473 = vlaneseq
        %v474 = vshrl.u32 %v473, 7
        %v475 = vsub.s32 0, %v474
        %v476 = vrot.slane %v251, %v475
        %v480 = vunpack.c.l.b16 %v470
        %v481 = vunpack.c.l.b16 %v471
        %v482 = vpack.c.b16 %v481, %v480
        %vm484 = vcmask 130048
        %v485 = vsel %vm484, %v463, 0
        %v487 = vsel %vm484, %v465, 0
        %v489 = vsel %vm484, %v467, 0
        %v491 = vsel %vm484, %v469, 0
        %493 = vmatprep.subr.bf16.mxu0 0
        %494 = vmatpush1.bf16.msra.mxu0 0
        %495 = vmatprep.subr.bf16.mxu0 0
        %496 = vmatpush1.bf16.msra.mxu0 0
        %497 = vmatprep.subr.bf16.mxu0 0
        %498 = vmatpush1.bf16.msra.mxu0 0
        %499 = vmatprep.subr.bf16.mxu0 0
        %500 = vmatpush1.bf16.msra.mxu0 0
        %501 = vmatprep.subr.bf16.mxu0 0
        %502 = vmatpush1.bf16.msra.mxu0 0
        %503 = vmatprep.subr.bf16.mxu0 0
        %504 = vmatpush1.bf16.msra.mxu0 0
        %505 = vmatprep.subr.bf16.mxu0 0
        %506 = vmatpush1.bf16.msra.mxu0 0
        %507 = vmatprep.subr.bf16.mxu0 0
        %508 = vmatpush1.bf16.msra.mxu0 %v482
        %509 = vmatprep.subr.bf16.mxu0 0
        %510 = vmatpush2.bf16.msra.mxu0 0
        %511 = vmatprep.subr.bf16.mxu0 0
        %512 = vmatpush2.bf16.msra.mxu0 0
        %513 = vmatprep.subr.bf16.mxu0 0
        %514 = vmatpush2.bf16.msra.mxu0 0
        %515 = vmatprep.subr.bf16.mxu0 0
        %516 = vmatpush2.bf16.msra.mxu0 0
        %517 = vmatprep.subr.bf16.mxu0 0
        %518 = vmatpush2.bf16.msra.mxu0 0
        %519 = vmatprep.subr.bf16.mxu0 0
        %520 = vmatpush2.bf16.msra.mxu0 0
        %521 = vmatprep.subr.bf16.mxu0 0
        %522 = vmatpush2.bf16.msra.mxu0 0
        %523 = vmatprep.subr.bf16.mxu0 0
        %524 = vmatpush2.bf16.msra.mxu0 0
        %525 = vmatprep.mubr.bf16.mxu0 0
        %526 = vmatmul.mubr.bf16.gmra.mxu0 %v485
        %v527 = vpop.f32.mrf.mxu0
        %v528 = vadd.f32 %v476, %v527
        %v529 = vpop.f32.mrf.mxu0
        %v530 = vpop.f32.mrf.mxu0
        %v531 = vadd.f32 %v476, %v530
        %v532 = vpop.f32.mrf.mxu0
        %533 = vmatprep.mubr.bf16.mxu0 0
        %534 = vmatmul.mubr.bf16.gmra.mxu0 %v487
        %v535 = vpop.f32.mrf.mxu0
        %v536 = vadd.f32 %v476, %v535
        %v537 = vpop.f32.mrf.mxu0
        %v538 = vpop.f32.mrf.mxu0
        %v539 = vadd.f32 %v476, %v538
        %v540 = vpop.f32.mrf.mxu0
        %541 = vmatprep.mubr.bf16.mxu0 0
        %542 = vmatmul.mubr.bf16.gmra.mxu0 %v489
        %v543 = vpop.f32.mrf.mxu0
        %v544 = vadd.f32 %v476, %v543
        %v545 = vpop.f32.mrf.mxu0
        %v546 = vpop.f32.mrf.mxu0
        %v547 = vadd.f32 %v476, %v546
        %v548 = vpop.f32.mrf.mxu0
        %549 = vmatprep.mubr.bf16.mxu0 0
        %550 = vmatmul.mubr.bf16.gmra.mxu0 %v491
        %v551 = vpop.f32.mrf.mxu0
        %v552 = vadd.f32 %v476, %v551
        %v553 = vpop.f32.mrf.mxu0
        %v554 = vpop.f32.mrf.mxu0
        %v555 = vadd.f32 %v476, %v554
        %v556 = vpop.f32.mrf.mxu0
        %557 = vdwg.mxu0
        %558 = vst [vmem:[%s203] sm:$0xff] %v528
        %559 = vst [vmem:[%s203 + $0x8] sm:$0xff] %v531
        %560 = vst [vmem:[%s203 + $0x10] sm:$0xff] %v536
        %561 = vst [vmem:[%s203 + $0x18] sm:$0xff] %v539
        %562 = vst [vmem:[%s203 + $0x20] sm:$0xff] %v544
        %563 = vst [vmem:[%s203 + $0x28] sm:$0xff] %v547
        %564 = vst [vmem:[%s203 + $0x30] sm:$0xff] %v552
        %565 = vst [vmem:[%s203 + $0x38] sm:$0xff] %v555
        %v566 = vadd.f32 %v528, %v531
        %v567 = vadd.f32 %v566, %v536
        %v568 = vadd.f32 %v567, %v539
        %v569 = vadd.f32 %v568, %v544
        %v570 = vadd.f32 %v569, %v547
        %v571 = vadd.f32 %v570, %v552
        %v572 = vadd.f32 %v571, %v555
        %v573 = vrot.slane %v572, 4
        %v574 = vadd.f32 %v572, %v573
        %v575 = vrot.slane %v574, 2
        %v576 = vadd.f32 %v574, %v575
        %v577 = vrot.slane %v576, 1
        %v578 = vadd.f32 %v576, %v577
        %v579 = vadd.f32 %v578, 0.0
        %v580 = vmul.f32 %v528, %v528
        %v581 = vmul.f32 %v531, %v531
        %v582 = vmul.f32 %v536, %v536
        %v583 = vmul.f32 %v539, %v539
        %v584 = vmul.f32 %v544, %v544
        %v585 = vmul.f32 %v547, %v547
        %v586 = vmul.f32 %v552, %v552
        %v587 = vmul.f32 %v555, %v555
        %v588 = vadd.f32 %v580, %v581
        %v589 = vadd.f32 %v588, %v582
        %v590 = vadd.f32 %v589, %v583
        %v591 = vadd.f32 %v590, %v584
        %v592 = vadd.f32 %v591, %v585
        %v593 = vadd.f32 %v592, %v586
        %v594 = vadd.f32 %v593, %v587
        %v595 = vrot.slane %v594, 4
        %v596 = vadd.f32 %v594, %v595
        %v597 = vrot.slane %v596, 2
        %v598 = vadd.f32 %v596, %v597
        %v599 = vrot.slane %v598, 1
        %v600 = vadd.f32 %v598, %v599
        %v601 = vadd.f32 %v600, 0.0
        %vm606 = vcmask 1042432
        %vm607 = vcmask 1046532
        %vm608 = vmor %vm606, %vm607
        %v609 = vrot.slane %v233, 5
        %v610 = vrot.slane %v609, 4
        %v611 = vrot.slane %v234, 5
        %v612 = vsel %vm608, %v610, %v611
        %v613 = vrot.slane %v611, 4
        %v614 = vrot.slane %v235, 5
        %v615 = vsel %vm608, %v613, %v614
        %v616 = vrot.slane %v236, 5
        %v617 = vrot.slane %v616, 4
        %v618 = vrot.slane %v237, 5
        %v619 = vsel %vm608, %v617, %v618
        %v620 = vrot.slane %v618, 4
        %v621 = vrot.slane %v238, 5
        %v622 = vsel %vm608, %v620, %v621
        %v623 = vrot.slane %v239, 5
        %v624 = vrot.slane %v623, 4
        %v625 = vrot.slane %v240, 5
        %v626 = vsel %vm608, %v624, %v625
        %v627 = vrot.slane %v625, 4
        %v628 = vrot.slane %v241, 5
        %v629 = vsel %vm608, %v627, %v628
        %v630 = vrot.slane %v242, 5
        %v631 = vrot.slane %v630, 4
        %v632 = vrot.slane %v243, 5
        %v633 = vsel %vm608, %v631, %v632
        %v634 = vrot.slane %v632, 4
        %v635 = vrot.slane %v244, 5
        %v636 = vsel %vm608, %v634, %v635
        %v638 = vrot.slane %v245, 5
        %v639 = vrot.slane %v638, 4
        %v640 = vrot.slane %v246, 5
        %v641 = vsel %vm608, %v639, %v640
        %v642 = vrot.slane %v640, 4
        %v643 = vrot.slane %v247, 5
        %v644 = vsel %vm608, %v642, %v643
        %v645 = vunpack.c.l.b16 %v612
        %v646 = vunpack.c.l.b16 %v615
        %v647 = vunpack.c.l.b16 %v619
        %v648 = vunpack.c.l.b16 %v622
        %v649 = vunpack.c.l.b16 %v626
        %v650 = vunpack.c.l.b16 %v629
        %v651 = vunpack.c.l.b16 %v633
        %v652 = vunpack.c.l.b16 %v636
        %v653 = vpack.c.b16 %v646, %v645
        %v654 = vpack.c.b16 %v648, %v647
        %v655 = vpack.c.b16 %v650, %v649
        %v656 = vpack.c.b16 %v652, %v651
        %657 = vrot.lane.b32.xlu0 %v653, 4
        %v658 = vpop.permute.xlu0 %657
        %659 = vrot.lane.b32.xlu0 %v654, 4
        %v660 = vpop.permute.xlu0 %659
        %661 = vrot.lane.b32.xlu0 %v655, 4
        %v662 = vpop.permute.xlu0 %661
        %663 = vrot.lane.b32.xlu0 %v656, 4
        %v664 = vpop.permute.xlu0 %663
        %665 = vrot.lane.b32.xlu0 %v404, 8
        %v666 = vpop.permute.xlu0 %665
        %667 = vrot.lane.b32.xlu0 %v405, 8
        %v668 = vpop.permute.xlu0 %667
        %669 = vrot.lane.b32.xlu0 %v406, 8
        %v670 = vpop.permute.xlu0 %669
        %671 = vrot.lane.b32.xlu0 %v430, 8
        %v672 = vpop.permute.xlu0 %671
        %v673 = vunpack.c.l.b16 %v641
        %v674 = vunpack.c.l.b16 %v644
        %v675 = vpack.c.b16 %v674, %v673
        %676 = vrot.lane.b32.xlu0 %v654, 12
        %v677 = vpop.permute.xlu0 %676
        %678 = vrot.lane.b32.xlu0 %v655, 12
        %v679 = vpop.permute.xlu0 %678
        %680 = vrot.lane.b32.xlu0 %v656, 12
        %v681 = vpop.permute.xlu0 %680
        %682 = vrot.lane.b32.xlu0 %v675, 12
        %v683 = vpop.permute.xlu0 %682
        %v686 = vsel %vm439, %v403, %v658
        %v689 = vsel %vm439, %v404, %v660
        %v692 = vsel %vm439, %v405, %v662
        %v695 = vsel %vm439, %v406, %v664
        %v697 = vsel %vm452, %v686, %v666
        %v699 = vsel %vm452, %v689, %v668
        %v701 = vsel %vm452, %v692, %v670
        %v703 = vsel %vm452, %v695, %v672
        %v705 = vsel %vm461, %v697, %v677
        %v707 = vsel %vm461, %v699, %v679
        %v709 = vsel %vm461, %v701, %v681
        %v711 = vsel %vm461, %v703, %v683
        %s712 = scalar_lea.vmem %s1, 8
        %v713 = vld [vmem:[%s712] sm:$0xf]
        %v714 = vld [vmem:[%s712 + $0x4] sm:$0xf]
        %v717 = vunpack.c.l.b16 %v713
        %v718 = vunpack.c.l.b16 %v714
        %v719 = vpack.c.b16 %v718, %v717
        %v721 = vsel %vm484, %v705, 0
        %v723 = vsel %vm484, %v707, 0
        %v725 = vsel %vm484, %v709, 0
        %v727 = vsel %vm484, %v711, 0
        %729 = vmatprep.subr.bf16.mxu0 0
        %730 = vmatpush1.bf16.msra.mxu0 0
        %731 = vmatprep.subr.bf16.mxu0 0
        %732 = vmatpush1.bf16.msra.mxu0 0
        %733 = vmatprep.subr.bf16.mxu0 0
        %734 = vmatpush1.bf16.msra.mxu0 0
        %735 = vmatprep.subr.bf16.mxu0 0
        %736 = vmatpush1.bf16.msra.mxu0 0
        %737 = vmatprep.subr.bf16.mxu0 0
        %738 = vmatpush1.bf16.msra.mxu0 0
        %739 = vmatprep.subr.bf16.mxu0 0
        %740 = vmatpush1.bf16.msra.mxu0 0
        %741 = vmatprep.subr.bf16.mxu0 0
        %742 = vmatpush1.bf16.msra.mxu0 0
        %743 = vmatprep.subr.bf16.mxu0 0
        %744 = vmatpush1.bf16.msra.mxu0 %v719
        %745 = vmatprep.subr.bf16.mxu0 0
        %746 = vmatpush2.bf16.msra.mxu0 0
        %747 = vmatprep.subr.bf16.mxu0 0
        %748 = vmatpush2.bf16.msra.mxu0 0
        %749 = vmatprep.subr.bf16.mxu0 0
        %750 = vmatpush2.bf16.msra.mxu0 0
        %751 = vmatprep.subr.bf16.mxu0 0
        %752 = vmatpush2.bf16.msra.mxu0 0
        %753 = vmatprep.subr.bf16.mxu0 0
        %754 = vmatpush2.bf16.msra.mxu0 0
        %755 = vmatprep.subr.bf16.mxu0 0
        %756 = vmatpush2.bf16.msra.mxu0 0
        %757 = vmatprep.subr.bf16.mxu0 0
        %758 = vmatpush2.bf16.msra.mxu0 0
        %759 = vmatprep.subr.bf16.mxu0 0
        %760 = vmatpush2.bf16.msra.mxu0 0
        %761 = vmatprep.mubr.bf16.mxu0 0
        %762 = vmatmul.mubr.bf16.gmra.mxu0 %v721
        %v763 = vpop.f32.mrf.mxu0
        %v764 = vadd.f32 %v476, %v763
        %v765 = vpop.f32.mrf.mxu0
        %v766 = vpop.f32.mrf.mxu0
        %v767 = vadd.f32 %v476, %v766
        %v768 = vpop.f32.mrf.mxu0
        %769 = vmatprep.mubr.bf16.mxu0 0
        %770 = vmatmul.mubr.bf16.gmra.mxu0 %v723
        %v771 = vpop.f32.mrf.mxu0
        %v772 = vadd.f32 %v476, %v771
        %v773 = vpop.f32.mrf.mxu0
        %v774 = vpop.f32.mrf.mxu0
        %v775 = vadd.f32 %v476, %v774
        %v776 = vpop.f32.mrf.mxu0
        %777 = vmatprep.mubr.bf16.mxu0 0
        %778 = vmatmul.mubr.bf16.gmra.mxu0 %v725
        %v779 = vpop.f32.mrf.mxu0
        %v780 = vadd.f32 %v476, %v779
        %v781 = vpop.f32.mrf.mxu0
        %v782 = vpop.f32.mrf.mxu0
        %v783 = vadd.f32 %v476, %v782
        %v784 = vpop.f32.mrf.mxu0
        %785 = vmatprep.mubr.bf16.mxu0 0
        %786 = vmatmul.mubr.bf16.gmra.mxu0 %v727
        %v787 = vpop.f32.mrf.mxu0
        %v788 = vadd.f32 %v476, %v787
        %v789 = vpop.f32.mrf.mxu0
        %v790 = vpop.f32.mrf.mxu0
        %v791 = vadd.f32 %v476, %v790
        %v792 = vpop.f32.mrf.mxu0
        %793 = vdwg.mxu0
        %s794 = scalar_lea.vmem %s203, 64 [#allocation2]
        %795 = vst [vmem:[%s794] sm:$0xff] %v764
        %796 = vst [vmem:[%s794 + $0x8] sm:$0xff] %v767
        %797 = vst [vmem:[%s794 + $0x10] sm:$0xff] %v772
        %798 = vst [vmem:[%s794 + $0x18] sm:$0xff] %v775
        %799 = vst [vmem:[%s794 + $0x20] sm:$0xff] %v780
        %800 = vst [vmem:[%s794 + $0x28] sm:$0xff] %v783
        %801 = vst [vmem:[%s794 + $0x30] sm:$0xff] %v788
        %802 = vst [vmem:[%s794 + $0x38] sm:$0xff] %v791
        %v803 = vadd.f32 %v764, %v767
        %v804 = vadd.f32 %v803, %v772
        %v805 = vadd.f32 %v804, %v775
        %v806 = vadd.f32 %v805, %v780
        %v807 = vadd.f32 %v806, %v783
        %v808 = vadd.f32 %v807, %v788
        %v809 = vadd.f32 %v808, %v791
        %v810 = vrot.slane %v809, 4
        %v811 = vadd.f32 %v809, %v810
        %v812 = vrot.slane %v811, 2
        %v813 = vadd.f32 %v811, %v812
        %v814 = vrot.slane %v813, 1
        %v815 = vadd.f32 %v813, %v814
        %v816 = vadd.f32 %v579, %v815
        %v817 = vmul.f32 %v764, %v764
        %v818 = vmul.f32 %v767, %v767
        %v819 = vmul.f32 %v772, %v772
        %v820 = vmul.f32 %v775, %v775
        %v821 = vmul.f32 %v780, %v780
        %v822 = vmul.f32 %v783, %v783
        %v823 = vmul.f32 %v788, %v788
        %v824 = vmul.f32 %v791, %v791
        %v825 = vadd.f32 %v817, %v818
        %v826 = vadd.f32 %v825, %v819
        %v827 = vadd.f32 %v826, %v820
        %v828 = vadd.f32 %v827, %v821
        %v829 = vadd.f32 %v828, %v822
        %v830 = vadd.f32 %v829, %v823
        %v831 = vadd.f32 %v830, %v824
        %v832 = vrot.slane %v831, 4
        %v833 = vadd.f32 %v831, %v832
        %v834 = vrot.slane %v833, 2
        %v835 = vadd.f32 %v833, %v834
        %v836 = vrot.slane %v835, 1
        %v837 = vadd.f32 %v835, %v836
        %v838 = vadd.f32 %v601, %v837
        %v840 = vshrl.u32 %v248, 16
        %v842 = vrot.slane %v840, 4
        %v843 = vshll.u32 %v248, 16
        %v845 = vrot.slane %v843, 5
        %v846 = vor.u32 %v842, %v845
        %v847 = vrot.slane %v846, 4
        %v849 = vshll.u32 %v249, 16
        %v851 = vrot.slane %v849, 5
        %v852 = vsel %vm254, %v847, %v851
        %v853 = vshrl.u32 %v249, 16
        %v855 = vrot.slane %v853, 4
        %v856 = vor.u32 %v855, %v851
        %v857 = vrot.slane %v856, 4
        %v859 = vshll.u32 %v250, 16
        %v861 = vrot.slane %v859, 5
        %v862 = vsel %vm254, %v857, %v861
        %863 = vrot.lane.b32.xlu0 %v430, 4
        %v864 = vpop.permute.xlu0 %863
        %v867 = vunpack.c.l.b16 %v248
        %v868 = vunpack.c.l.b16 %v249
        %v869 = vpack.c.b16 %v868, %v867
        %870 = vrot.lane.b32.xlu0 %v869, 8
        %v871 = vpop.permute.xlu0 %870
        %v872 = vunpack.c.l.b16 %v852
        %v873 = vunpack.c.l.b16 %v862
        %v874 = vpack.c.b16 %v873, %v872
        %875 = vrot.lane.b32.xlu0 %v874, 12
        %v876 = vpop.permute.xlu0 %875
        %v879 = vsel %vm439, %v419, %v864
        %v881 = vsel %vm452, %v879, %v871
        %v883 = vsel %vm461, %v881, %v876
        %s884 = scalar_lea.vmem %s1, 16
        %v885 = vld [vmem:[%s884] sm:$0xf]
        %v886 = vld [vmem:[%s884 + $0x4] sm:$0xf]
        %v889 = vunpack.c.l.b16 %v885
        %v890 = vunpack.c.l.b16 %v886
        %v891 = vpack.c.b16 %v890, %v889
        %v893 = vsel %vm484, %v883, 0
        %895 = vmatprep.subr.bf16.mxu0 0
        %896 = vmatpush1.bf16.msra.mxu0 0
        %897 = vmatprep.subr.bf16.mxu0 0
        %898 = vmatpush1.bf16.msra.mxu0 0
        %899 = vmatprep.subr.bf16.mxu0 0
        %900 = vmatpush1.bf16.msra.mxu0 0
        %901 = vmatprep.subr.bf16.mxu0 0
        %902 = vmatpush1.bf16.msra.mxu0 0
        %903 = vmatprep.subr.bf16.mxu0 0
        %904 = vmatpush1.bf16.msra.mxu0 0
        %905 = vmatprep.subr.bf16.mxu0 0
        %906 = vmatpush1.bf16.msra.mxu0 0
        %907 = vmatprep.subr.bf16.mxu0 0
        %908 = vmatpush1.bf16.msra.mxu0 0
        %909 = vmatprep.subr.bf16.mxu0 0
        %910 = vmatpush1.bf16.msra.mxu0 %v891
        %911 = vmatprep.subr.bf16.mxu0 0
        %912 = vmatpush2.bf16.msra.mxu0 0
        %913 = vmatprep.subr.bf16.mxu0 0
        %914 = vmatpush2.bf16.msra.mxu0 0
        %915 = vmatprep.subr.bf16.mxu0 0
        %916 = vmatpush2.bf16.msra.mxu0 0
        %917 = vmatprep.subr.bf16.mxu0 0
        %918 = vmatpush2.bf16.msra.mxu0 0
        %919 = vmatprep.subr.bf16.mxu0 0
        %920 = vmatpush2.bf16.msra.mxu0 0
        %921 = vmatprep.subr.bf16.mxu0 0
        %922 = vmatpush2.bf16.msra.mxu0 0
        %923 = vmatprep.subr.bf16.mxu0 0
        %924 = vmatpush2.bf16.msra.mxu0 0
        %925 = vmatprep.subr.bf16.mxu0 0
        %926 = vmatpush2.bf16.msra.mxu0 0
        %927 = vmatprep.mubr.bf16.mxu0 0
        %928 = vmatmul.mubr.bf16.gmra.mxu0 %v487
        %v929 = vpop.f32.mrf.mxu0
        %v930 = vadd.f32 %v476, %v929
        %v931 = vpop.f32.mrf.mxu0
        %v932 = vpop.f32.mrf.mxu0
        %v933 = vadd.f32 %v476, %v932
        %v934 = vpop.f32.mrf.mxu0
        %935 = vmatprep.mubr.bf16.mxu0 0
        %936 = vmatmul.mubr.bf16.gmra.mxu0 %v489
        %v937 = vpop.f32.mrf.mxu0
        %v938 = vadd.f32 %v476, %v937
        %v939 = vpop.f32.mrf.mxu0
        %v940 = vpop.f32.mrf.mxu0
        %v941 = vadd.f32 %v476, %v940
        %v942 = vpop.f32.mrf.mxu0
        %943 = vmatprep.mubr.bf16.mxu0 0
        %944 = vmatmul.mubr.bf16.gmra.mxu0 %v491
        %v945 = vpop.f32.mrf.mxu0
        %v946 = vadd.f32 %v476, %v945
        %v947 = vpop.f32.mrf.mxu0
        %v948 = vpop.f32.mrf.mxu0
        %v949 = vadd.f32 %v476, %v948
        %v950 = vpop.f32.mrf.mxu0
        %951 = vmatprep.mubr.bf16.mxu0 0
        %952 = vmatmul.mubr.bf16.gmra.mxu0 %v893
        %v953 = vpop.f32.mrf.mxu0
        %v954 = vadd.f32 %v476, %v953
        %v955 = vpop.f32.mrf.mxu0
        %v956 = vpop.f32.mrf.mxu0
        %v957 = vadd.f32 %v476, %v956
        %v958 = vpop.f32.mrf.mxu0
        %959 = vdwg.mxu0
        %s960 = scalar_lea.vmem %s203, 128 [#allocation2]
        %961 = vst [vmem:[%s960] sm:$0xff] %v930
        %962 = vst [vmem:[%s960 + $0x8] sm:$0xff] %v933
        %963 = vst [vmem:[%s960 + $0x10] sm:$0xff] %v938
        %964 = vst [vmem:[%s960 + $0x18] sm:$0xff] %v941
        %965 = vst [vmem:[%s960 + $0x20] sm:$0xff] %v946
        %966 = vst [vmem:[%s960 + $0x28] sm:$0xff] %v949
        %967 = vst [vmem:[%s960 + $0x30] sm:$0xff] %v954
        %968 = vst [vmem:[%s960 + $0x38] sm:$0xff] %v957
        %v969 = vadd.f32 %v930, %v933
        %v970 = vadd.f32 %v969, %v938
        %v971 = vadd.f32 %v970, %v941
        %v972 = vadd.f32 %v971, %v946
        %v973 = vadd.f32 %v972, %v949
        %v974 = vadd.f32 %v973, %v954
        %v975 = vadd.f32 %v974, %v957
        %v976 = vrot.slane %v975, 4
        %v977 = vadd.f32 %v975, %v976
        %v978 = vrot.slane %v977, 2
        %v979 = vadd.f32 %v977, %v978
        %v980 = vrot.slane %v979, 1
        %v981 = vadd.f32 %v979, %v980
        %v982 = vadd.f32 %v816, %v981
        %v983 = vmul.f32 %v930, %v930
        %v984 = vmul.f32 %v933, %v933
        %v985 = vmul.f32 %v938, %v938
        %v986 = vmul.f32 %v941, %v941
        %v987 = vmul.f32 %v946, %v946
        %v988 = vmul.f32 %v949, %v949
        %v989 = vmul.f32 %v954, %v954
        %v990 = vmul.f32 %v957, %v957
        %v991 = vadd.f32 %v983, %v984
        %v992 = vadd.f32 %v991, %v985
        %v993 = vadd.f32 %v992, %v986
        %v994 = vadd.f32 %v993, %v987
        %v995 = vadd.f32 %v994, %v988
        %v996 = vadd.f32 %v995, %v989
        %v997 = vadd.f32 %v996, %v990
        %v998 = vrot.slane %v997, 4
        %v999 = vadd.f32 %v997, %v998
        %v1000 = vrot.slane %v999, 2
        %v1001 = vadd.f32 %v999, %v1000
        %v1002 = vrot.slane %v1001, 1
        %v1003 = vadd.f32 %v1001, %v1002
        %v1004 = vadd.f32 %v838, %v1003
        %v1006 = vrot.slane %v248, 5
        %v1007 = vrot.slane %v1006, 4
        %v1008 = vrot.slane %v249, 5
        %v1009 = vsel %vm608, %v1007, %v1008
        %v1010 = vrot.slane %v1008, 4
        %v1011 = vrot.slane %v250, 5
        %v1012 = vsel %vm608, %v1010, %v1011
        %1013 = vrot.lane.b32.xlu0 %v675, 4
        %v1014 = vpop.permute.xlu0 %1013
        %1015 = vrot.lane.b32.xlu0 %v874, 8
        %v1016 = vpop.permute.xlu0 %1015
        %v1017 = vunpack.c.l.b16 %v1009
        %v1018 = vunpack.c.l.b16 %v1012
        %v1019 = vpack.c.b16 %v1018, %v1017
        %1020 = vrot.lane.b32.xlu0 %v1019, 12
        %v1021 = vpop.permute.xlu0 %1020
        %v1024 = vsel %vm439, %v430, %v1014
        %v1026 = vsel %vm452, %v1024, %v1016
        %v1028 = vsel %vm461, %v1026, %v1021
        %s1029 = scalar_lea.vmem %s1, 24
        %v1030 = vld [vmem:[%s1029] sm:$0xf]
        %v1031 = vld [vmem:[%s1029 + $0x4] sm:$0xf]
        %v1034 = vunpack.c.l.b16 %v1030
        %v1035 = vunpack.c.l.b16 %v1031
        %v1036 = vpack.c.b16 %v1035, %v1034
        %v1038 = vsel %vm484, %v1028, 0
        %1040 = vmatprep.subr.bf16.mxu0 0
        %1041 = vmatpush1.bf16.msra.mxu0 0
        %1042 = vmatprep.subr.bf16.mxu0 0
        %1043 = vmatpush1.bf16.msra.mxu0 0
        %1044 = vmatprep.subr.bf16.mxu0 0
        %1045 = vmatpush1.bf16.msra.mxu0 0
        %1046 = vmatprep.subr.bf16.mxu0 0
        %1047 = vmatpush1.bf16.msra.mxu0 0
        %1048 = vmatprep.subr.bf16.mxu0 0
        %1049 = vmatpush1.bf16.msra.mxu0 0
        %1050 = vmatprep.subr.bf16.mxu0 0
        %1051 = vmatpush1.bf16.msra.mxu0 0
        %1052 = vmatprep.subr.bf16.mxu0 0
        %1053 = vmatpush1.bf16.msra.mxu0 0
        %1054 = vmatprep.subr.bf16.mxu0 0
        %1055 = vmatpush1.bf16.msra.mxu0 %v1036
        %1056 = vmatprep.subr.bf16.mxu0 0
        %1057 = vmatpush2.bf16.msra.mxu0 0
        %1058 = vmatprep.subr.bf16.mxu0 0
        %1059 = vmatpush2.bf16.msra.mxu0 0
        %1060 = vmatprep.subr.bf16.mxu0 0
        %1061 = vmatpush2.bf16.msra.mxu0 0
        %1062 = vmatprep.subr.bf16.mxu0 0
        %1063 = vmatpush2.bf16.msra.mxu0 0
        %1064 = vmatprep.subr.bf16.mxu0 0
        %1065 = vmatpush2.bf16.msra.mxu0 0
        %1066 = vmatprep.subr.bf16.mxu0 0
        %1067 = vmatpush2.bf16.msra.mxu0 0
        %1068 = vmatprep.subr.bf16.mxu0 0
        %1069 = vmatpush2.bf16.msra.mxu0 0
        %1070 = vmatprep.subr.bf16.mxu0 0
        %1071 = vmatpush2.bf16.msra.mxu0 0
        %1072 = vmatprep.mubr.bf16.mxu0 0
        %1073 = vmatmul.mubr.bf16.gmra.mxu0 %v723
        %v1074 = vpop.f32.mrf.mxu0
        %v1075 = vadd.f32 %v476, %v1074
        %v1076 = vpop.f32.mrf.mxu0
        %v1077 = vpop.f32.mrf.mxu0
        %v1078 = vadd.f32 %v476, %v1077
        %v1079 = vpop.f32.mrf.mxu0
        %1080 = vmatprep.mubr.bf16.mxu0 0
        %1081 = vmatmul.mubr.bf16.gmra.mxu0 %v725
        %v1082 = vpop.f32.mrf.mxu0
        %v1083 = vadd.f32 %v476, %v1082
        %v1084 = vpop.f32.mrf.mxu0
        %v1085 = vpop.f32.mrf.mxu0
        %v1086 = vadd.f32 %v476, %v1085
        %v1087 = vpop.f32.mrf.mxu0
        %1088 = vmatprep.mubr.bf16.mxu0 0
        %1089 = vmatmul.mubr.bf16.gmra.mxu0 %v727
        %v1090 = vpop.f32.mrf.mxu0
        %v1091 = vadd.f32 %v476, %v1090
        %v1092 = vpop.f32.mrf.mxu0
        %v1093 = vpop.f32.mrf.mxu0
        %v1094 = vadd.f32 %v476, %v1093
        %v1095 = vpop.f32.mrf.mxu0
        %1096 = vmatprep.mubr.bf16.mxu0 0
        %1097 = vmatmul.mubr.bf16.gmra.mxu0 %v1038
        %v1098 = vpop.f32.mrf.mxu0
        %v1099 = vadd.f32 %v476, %v1098
        %v1100 = vpop.f32.mrf.mxu0
        %v1101 = vpop.f32.mrf.mxu0
        %v1102 = vadd.f32 %v476, %v1101
        %v1103 = vpop.f32.mrf.mxu0
        %1104 = vdwg.mxu0
        %s1105 = scalar_lea.vmem %s203, 192 [#allocation2]
        %1106 = vst [vmem:[%s1105] sm:$0xff] %v1075
        %1107 = vst [vmem:[%s1105 + $0x8] sm:$0xff] %v1078
        %1108 = vst [vmem:[%s1105 + $0x10] sm:$0xff] %v1083
        %1109 = vst [vmem:[%s1105 + $0x18] sm:$0xff] %v1086
        %1110 = vst [vmem:[%s1105 + $0x20] sm:$0xff] %v1091
        %1111 = vst [vmem:[%s1105 + $0x28] sm:$0xff] %v1094
        %1112 = vst [vmem:[%s1105 + $0x30] sm:$0xff] %v1099
        %1113 = vst [vmem:[%s1105 + $0x38] sm:$0xff] %v1102
        %v1114 = vadd.f32 %v1075, %v1078
        %v1115 = vadd.f32 %v1114, %v1083
        %v1116 = vadd.f32 %v1115, %v1086
        %v1117 = vadd.f32 %v1116, %v1091
        %v1118 = vadd.f32 %v1117, %v1094
        %v1119 = vadd.f32 %v1118, %v1099
        %v1120 = vadd.f32 %v1119, %v1102
        %v1121 = vrot.slane %v1120, 4
        %v1122 = vadd.f32 %v1120, %v1121
        %v1123 = vrot.slane %v1122, 2
        %v1124 = vadd.f32 %v1122, %v1123
        %v1125 = vrot.slane %v1124, 1
        %v1126 = vadd.f32 %v1124, %v1125
        %v1127 = vadd.f32 %v982, %v1126
        %v1128 = vmul.f32 %v1075, %v1075
        %v1129 = vmul.f32 %v1078, %v1078
        %v1130 = vmul.f32 %v1083, %v1083
        %v1131 = vmul.f32 %v1086, %v1086
        %v1132 = vmul.f32 %v1091, %v1091
        %v1133 = vmul.f32 %v1094, %v1094
        %v1134 = vmul.f32 %v1099, %v1099
        %v1135 = vmul.f32 %v1102, %v1102
        %v1136 = vadd.f32 %v1128, %v1129
        %v1137 = vadd.f32 %v1136, %v1130
        %v1138 = vadd.f32 %v1137, %v1131
        %v1139 = vadd.f32 %v1138, %v1132
        %v1140 = vadd.f32 %v1139, %v1133
        %v1141 = vadd.f32 %v1140, %v1134
        %v1142 = vadd.f32 %v1141, %v1135
        %v1143 = vrot.slane %v1142, 4
        %v1144 = vadd.f32 %v1142, %v1143
        %v1145 = vrot.slane %v1144, 2
        %v1146 = vadd.f32 %v1144, %v1145
        %v1147 = vrot.slane %v1146, 1
        %v1148 = vadd.f32 %v1146, %v1147
        %v1149 = vadd.f32 %v1004, %v1148
        %1150 = vst [vmem:[%s227] sm:$0x1] %v1127
        %1151 = vst [vmem:[%s227 + $0x1] sm:$0x1] %v1149
        %s1152 = sand.u32 %s106, 1
        %s1153 = sand.u32 %s106, 1
        %s1154 = smul.addr %s1153, 256
        %s1155 = scalar_lea.vmem [#allocation2], %s1154
        %p1156 = scmp.lt.s32.totalorder %s20, 1
        %s1157 = scalar_select %p1156, %s20, 1
        %p1158 = scmp.lt.s32.totalorder %s21, 3
        %s1159 = scalar_select %p1158, %s21, 3
        %s1160 = smul.addr %s1157, 4
        %s1161 = sadd.s32 %s1159, %s1160
        %s1162 = smul.addr %s1161, 2
        %s1163 = scalar_lea.vmem %s4, %s1162
        // Predicated region
        $region33: #{unet_up_conv_block.2} parent=31 // pred_check
          %p1164 = pneg %p116
        $region34: #{unet_up_conv_block.2} parent=31 // pred_check_branch
          %1166 = sbr.rel (%p1164) target = $region36
        $region35: #{unet_up_conv_block.2} parent=31 // pred_region
          %s1167 = smul.u32 8, %s21
          %s1168 = smul.addr %s20, 128
          %s1169 = sadd.s32 %s1167, %s1168
          %s1170 = smul.addr %s1169, 8
          %s1171 = scalar_lea.vmem %s3, %s1170
          // Predicated region
          $region37: #{unet_up_conv_block.2} parent=35 // pred_check
            _
          $region38: #{unet_up_conv_block.2} parent=35 // pred_check_branch
            %1173 = sbr.rel (0) target = $region40
          $region39: #{unet_up_conv_block.2} parent=35 // pred_region
            // Predicated region
            $region41: #{unet_up_conv_block.2} parent=39 // pred_check
              _
            $region42: #{unet_up_conv_block.2} parent=39 // pred_check_branch
              %1175 = sbr.rel (0) target = $region44
            $region43: #{unet_up_conv_block.2} parent=39 // pred_region
              // Predicated region
              $region56: #{unet_up_conv_block.2} parent=43 // pred_check
                _
              $region57: #{unet_up_conv_block.2} parent=43 // pred_check_branch
                %1253 = sbr.rel (0) target = $region59
              $region58: #{unet_up_conv_block.2} parent=43 // pred_region
                loop: start=0, step=1, limit=1
                $region60: #{unet_up_conv_block.2} parent=58 // loop_pre_header
                  _
                $region61: #{unet_up_conv_block.2} parent=58 // loop_header
                  %s1255 = sphi 0, %s1259
                  %p1256 = scmp.ge.s32.totalorder %s1255, 1
                  %s1260 = sphi %s1155, %s1155
                  %s1261 = sphi %s1171, %s1171
                $region62: #{unet_up_conv_block.2} parent=58 // loop_header_branch
                  %1258 = sbr.rel (%p1256) target = $region66
                $region63: #{unet_up_conv_block.2} parent=58 // loop_body
                  %v1262 = vld [vmem:[%s1260] sm:$0xff]
                  %1263 = vst [vmem:[%s1261] sm:$0xff] %v1262
                  %v1264 = vld [vmem:[%s1260 + $0x8] sm:$0xff]
                  %1265 = vst [vmem:[%s1261 + $0x8] sm:$0xff] %v1264
                  %v1266 = vld [vmem:[%s1260 + $0x10] sm:$0xff]
                  %1267 = vst [vmem:[%s1261 + $0x10] sm:$0xff] %v1266
                  %v1268 = vld [vmem:[%s1260 + $0x18] sm:$0xff]
                  %1269 = vst [vmem:[%s1261 + $0x18] sm:$0xff] %v1268
                  %v1270 = vld [vmem:[%s1260 + $0x20] sm:$0xff]
                  %1271 = vst [vmem:[%s1261 + $0x20] sm:$0xff] %v1270
                  %v1272 = vld [vmem:[%s1260 + $0x28] sm:$0xff]
                  %1273 = vst [vmem:[%s1261 + $0x28] sm:$0xff] %v1272
                  %v1274 = vld [vmem:[%s1260 + $0x30] sm:$0xff]
                  %1275 = vst [vmem:[%s1261 + $0x30] sm:$0xff] %v1274
                  %v1276 = vld [vmem:[%s1260 + $0x38] sm:$0xff]
                  %1277 = vst [vmem:[%s1261 + $0x38] sm:$0xff] %v1276
                  %v1278 = vld [vmem:[%s1260 + $0x40] sm:$0xff]
                  %1279 = vst [vmem:[%s1261 + $0x100] sm:$0xff] %v1278
                  %v1280 = vld [vmem:[%s1260 + $0x48] sm:$0xff]
                  %1281 = vst [vmem:[%s1261 + $0x108] sm:$0xff] %v1280
                  %v1282 = vld [vmem:[%s1260 + $0x50] sm:$0xff]
                  %1283 = vst [vmem:[%s1261 + $0x110] sm:$0xff] %v1282
                  %v1284 = vld [vmem:[%s1260 + $0x58] sm:$0xff]
                  %1285 = vst [vmem:[%s1261 + $0x118] sm:$0xff] %v1284
                  %v1286 = vld [vmem:[%s1260 + $0x60] sm:$0xff]
                  %1287 = vst [vmem:[%s1261 + $0x120] sm:$0xff] %v1286
                  %v1288 = vld [vmem:[%s1260 + $0x68] sm:$0xff]
                  %1289 = vst [vmem:[%s1261 + $0x128] sm:$0xff] %v1288
                  %v1290 = vld [vmem:[%s1260 + $0x70] sm:$0xff]
                  %1291 = vst [vmem:[%s1261 + $0x130] sm:$0xff] %v1290
                  %v1292 = vld [vmem:[%s1260 + $0x78] sm:$0xff]
                  %1293 = vst [vmem:[%s1261 + $0x138] sm:$0xff] %v1292
                  %v1294 = vld [vmem:[%s1260 + $0x80] sm:$0xff]
                  %1295 = vst [vmem:[%s1261 + $0x200] sm:$0xff] %v1294
                  %v1296 = vld [vmem:[%s1260 + $0x88] sm:$0xff]
                  %1297 = vst [vmem:[%s1261 + $0x208] sm:$0xff] %v1296
                  %v1298 = vld [vmem:[%s1260 + $0x90] sm:$0xff]
                  %1299 = vst [vmem:[%s1261 + $0x210] sm:$0xff] %v1298
                  %v1300 = vld [vmem:[%s1260 + $0x98] sm:$0xff]
                  %1301 = vst [vmem:[%s1261 + $0x218] sm:$0xff] %v1300
                  %v1302 = vld [vmem:[%s1260 + $0xa0] sm:$0xff]
                  %1303 = vst [vmem:[%s1261 + $0x220] sm:$0xff] %v1302
                  %v1304 = vld [vmem:[%s1260 + $0xa8] sm:$0xff]
                  %1305 = vst [vmem:[%s1261 + $0x228] sm:$0xff] %v1304
                  %v1306 = vld [vmem:[%s1260 + $0xb0] sm:$0xff]
                  %1307 = vst [vmem:[%s1261 + $0x230] sm:$0xff] %v1306
                  %v1308 = vld [vmem:[%s1260 + $0xb8] sm:$0xff]
                  %1309 = vst [vmem:[%s1261 + $0x238] sm:$0xff] %v1308
                  %v1310 = vld [vmem:[%s1260 + $0xc0] sm:$0xff]
                  %1311 = vst [vmem:[%s1261 + $0x300] sm:$0xff] %v1310
                  %v1312 = vld [vmem:[%s1260 + $0xc8] sm:$0xff]
                  %1313 = vst [vmem:[%s1261 + $0x308] sm:$0xff] %v1312
                  %v1314 = vld [vmem:[%s1260 + $0xd0] sm:$0xff]
                  %1315 = vst [vmem:[%s1261 + $0x310] sm:$0xff] %v1314
                  %v1316 = vld [vmem:[%s1260 + $0xd8] sm:$0xff]
                  %1317 = vst [vmem:[%s1261 + $0x318] sm:$0xff] %v1316
                  %v1318 = vld [vmem:[%s1260 + $0xe0] sm:$0xff]
                  %1319 = vst [vmem:[%s1261 + $0x320] sm:$0xff] %v1318
                  %v1320 = vld [vmem:[%s1260 + $0xe8] sm:$0xff]
                  %1321 = vst [vmem:[%s1261 + $0x328] sm:$0xff] %v1320
                  %v1322 = vld [vmem:[%s1260 + $0xf0] sm:$0xff]
                  %1323 = vst [vmem:[%s1261 + $0x330] sm:$0xff] %v1322
                  %v1324 = vld [vmem:[%s1260 + $0xf8] sm:$0xff]
                  %1325 = vst [vmem:[%s1261 + $0x338] sm:$0xff] %v1324
                $region64: #{unet_up_conv_block.2} parent=58 // loop_footer
                  %s1259 = sadd.s32 1, %s1255
                $region65: #{unet_up_conv_block.2} parent=58 // loop_footer_branch
                  %1254 = sbr.rel target = $region61
                $region66: #{unet_up_conv_block.2} parent=58 // loop_exit
                  _
              $region59: #{unet_up_conv_block.2} parent=43 // pred_fallthru
                _
              // Predicated region
              $region67: #{unet_up_conv_block.2} parent=43 // pred_check
                _
              $region68: #{unet_up_conv_block.2} parent=43 // pred_check_branch
                %1327 = sbr.rel target = $region70
              $region69: #{unet_up_conv_block.2} parent=43 // pred_region
                _
              $region70: #{unet_up_conv_block.2} parent=43 // pred_fallthru
                _
            $region44: #{unet_up_conv_block.2} parent=39 // pred_fallthru
              _
            // Predicated region
            $region45: #{unet_up_conv_block.2} parent=39 // pred_check
              _
            $region46: #{unet_up_conv_block.2} parent=39 // pred_check_branch
              %1177 = sbr.rel target = $region48
            $region47: #{unet_up_conv_block.2} parent=39 // pred_region
              %s1179 = ssub.s32 256, 1
              loop: start=0, step=1, limit=1
              $region49: #{unet_up_conv_block.2} parent=47 // loop_pre_header
                _
              $region50: #{unet_up_conv_block.2} parent=47 // loop_header
                %s1181 = sphi 0, %s1185
                %p1182 = scmp.ge.s32.totalorder %s1181, 1
                %s1186 = sphi %s1155, %s1155
                %s1187 = sphi %s1171, %s1171
              $region51: #{unet_up_conv_block.2} parent=47 // loop_header_branch
                %1184 = sbr.rel (%p1182) target = $region55
              $region52: #{unet_up_conv_block.2} parent=47 // loop_body
                %v1188 = vld [vmem:[%s1186] sm:%s1179]
                %1189 = vst [vmem:[%s1187] sm:%s1179] %v1188
                %v1190 = vld [vmem:[%s1186 + $0x8] sm:%s1179]
                %1191 = vst [vmem:[%s1187 + $0x8] sm:%s1179] %v1190
                %v1192 = vld [vmem:[%s1186 + $0x10] sm:%s1179]
                %1193 = vst [vmem:[%s1187 + $0x10] sm:%s1179] %v1192
                %v1194 = vld [vmem:[%s1186 + $0x18] sm:%s1179]
                %1195 = vst [vmem:[%s1187 + $0x18] sm:%s1179] %v1194
                %v1196 = vld [vmem:[%s1186 + $0x20] sm:%s1179]
                %1197 = vst [vmem:[%s1187 + $0x20] sm:%s1179] %v1196
                %v1198 = vld [vmem:[%s1186 + $0x28] sm:%s1179]
                %1199 = vst [vmem:[%s1187 + $0x28] sm:%s1179] %v1198
                %v1200 = vld [vmem:[%s1186 + $0x30] sm:%s1179]
                %1201 = vst [vmem:[%s1187 + $0x30] sm:%s1179] %v1200
                %v1202 = vld [vmem:[%s1186 + $0x38] sm:%s1179]
                %1203 = vst [vmem:[%s1187 + $0x38] sm:%s1179] %v1202
                %v1204 = vld [vmem:[%s1186 + $0x40] sm:%s1179]
                %1205 = vst [vmem:[%s1187 + $0x100] sm:%s1179] %v1204
                %v1206 = vld [vmem:[%s1186 + $0x48] sm:%s1179]
                %1207 = vst [vmem:[%s1187 + $0x108] sm:%s1179] %v1206
                %v1208 = vld [vmem:[%s1186 + $0x50] sm:%s1179]
                %1209 = vst [vmem:[%s1187 + $0x110] sm:%s1179] %v1208
                %v1210 = vld [vmem:[%s1186 + $0x58] sm:%s1179]
                %1211 = vst [vmem:[%s1187 + $0x118] sm:%s1179] %v1210
                %v1212 = vld [vmem:[%s1186 + $0x60] sm:%s1179]
                %1213 = vst [vmem:[%s1187 + $0x120] sm:%s1179] %v1212
                %v1214 = vld [vmem:[%s1186 + $0x68] sm:%s1179]
                %1215 = vst [vmem:[%s1187 + $0x128] sm:%s1179] %v1214
                %v1216 = vld [vmem:[%s1186 + $0x70] sm:%s1179]
                %1217 = vst [vmem:[%s1187 + $0x130] sm:%s1179] %v1216
                %v1218 = vld [vmem:[%s1186 + $0x78] sm:%s1179]
                %1219 = vst [vmem:[%s1187 + $0x138] sm:%s1179] %v1218
                %v1220 = vld [vmem:[%s1186 + $0x80] sm:%s1179]
                %1221 = vst [vmem:[%s1187 + $0x200] sm:%s1179] %v1220
                %v1222 = vld [vmem:[%s1186 + $0x88] sm:%s1179]
                %1223 = vst [vmem:[%s1187 + $0x208] sm:%s1179] %v1222
                %v1224 = vld [vmem:[%s1186 + $0x90] sm:%s1179]
                %1225 = vst [vmem:[%s1187 + $0x210] sm:%s1179] %v1224
                %v1226 = vld [vmem:[%s1186 + $0x98] sm:%s1179]
                %1227 = vst [vmem:[%s1187 + $0x218] sm:%s1179] %v1226
                %v1228 = vld [vmem:[%s1186 + $0xa0] sm:%s1179]
                %1229 = vst [vmem:[%s1187 + $0x220] sm:%s1179] %v1228
                %v1230 = vld [vmem:[%s1186 + $0xa8] sm:%s1179]
                %1231 = vst [vmem:[%s1187 + $0x228] sm:%s1179] %v1230
                %v1232 = vld [vmem:[%s1186 + $0xb0] sm:%s1179]
                %1233 = vst [vmem:[%s1187 + $0x230] sm:%s1179] %v1232
                %v1234 = vld [vmem:[%s1186 + $0xb8] sm:%s1179]
                %1235 = vst [vmem:[%s1187 + $0x238] sm:%s1179] %v1234
                %v1236 = vld [vmem:[%s1186 + $0xc0] sm:%s1179]
                %1237 = vst [vmem:[%s1187 + $0x300] sm:%s1179] %v1236
                %v1238 = vld [vmem:[%s1186 + $0xc8] sm:%s1179]
                %1239 = vst [vmem:[%s1187 + $0x308] sm:%s1179] %v1238
                %v1240 = vld [vmem:[%s1186 + $0xd0] sm:%s1179]
                %1241 = vst [vmem:[%s1187 + $0x310] sm:%s1179] %v1240
                %v1242 = vld [vmem:[%s1186 + $0xd8] sm:%s1179]
                %1243 = vst [vmem:[%s1187 + $0x318] sm:%s1179] %v1242
                %v1244 = vld [vmem:[%s1186 + $0xe0] sm:%s1179]
                %1245 = vst [vmem:[%s1187 + $0x320] sm:%s1179] %v1244
                %v1246 = vld [vmem:[%s1186 + $0xe8] sm:%s1179]
                %1247 = vst [vmem:[%s1187 + $0x328] sm:%s1179] %v1246
                %v1248 = vld [vmem:[%s1186 + $0xf0] sm:%s1179]
                %1249 = vst [vmem:[%s1187 + $0x330] sm:%s1179] %v1248
                %v1250 = vld [vmem:[%s1186 + $0xf8] sm:%s1179]
                %1251 = vst [vmem:[%s1187 + $0x338] sm:%s1179] %v1250
              $region53: #{unet_up_conv_block.2} parent=47 // loop_footer
                %s1185 = sadd.s32 1, %s1181
              $region54: #{unet_up_conv_block.2} parent=47 // loop_footer_branch
                %1180 = sbr.rel target = $region50
              $region55: #{unet_up_conv_block.2} parent=47 // loop_exit
                _
            $region48: #{unet_up_conv_block.2} parent=39 // pred_fallthru
              _
          $region40: #{unet_up_conv_block.2} parent=35 // pred_fallthru
            _
          %1328 = vnop
        $region36: #{unet_up_conv_block.2} parent=31 // pred_fallthru
          _
        // Predicated region
        $region71: #{unet_up_conv_block.2} parent=31 // pred_check
          %p1329 = pneg %p144
        $region72: #{unet_up_conv_block.2} parent=31 // pred_check_branch
          %1331 = sbr.rel (%p1329) target = $region74
        $region73: #{unet_up_conv_block.2} parent=31 // pred_region
          _
        $region74: #{unet_up_conv_block.2} parent=31 // pred_fallthru
          _
      $region32: #{unet_up_conv_block.2} parent=5 // pred_fallthru
        _
      %p1332 = scmp.le.s32.totalorder 2, %s11
      // Predicated region
      $region75: #{unet_up_conv_block.2} parent=5 // pred_check
        %p1333 = pneg %p1332
      $region76: #{unet_up_conv_block.2} parent=5 // pred_check_branch
        %1335 = sbr.rel (%p1333) target = $region78
      $region77: #{unet_up_conv_block.2} parent=5 // pred_region
        %s1336 = ssub.s32 %s11, 2
        // Predicated region
        $region79: #{unet_up_conv_block.2} parent=77 // pred_check
          %p1337 = pneg %p122
        $region80: #{unet_up_conv_block.2} parent=77 // pred_check_branch
          %1339 = sbr.rel (%p1337) target = $region82
        $region81: #{unet_up_conv_block.2} parent=77 // pred_region
          %s1340 = sand.u32 %s107, 1
          %s1341 = sand.u32 %s107, 1
          %s1342 = smul.addr %s1341, 256
          %s1343 = scalar_lea.vmem [#allocation2], %s1342
        $region82: #{unet_up_conv_block.2} parent=77 // pred_fallthru
          _
        // Predicated region
        $region83: #{unet_up_conv_block.2} parent=77 // pred_check
          %p1344 = pneg %p150
        $region84: #{unet_up_conv_block.2} parent=77 // pred_check_branch
          %1346 = sbr.rel (%p1344) target = $region86
        $region85: #{unet_up_conv_block.2} parent=77 // pred_region
          %p1347 = scmp.lt.s32.totalorder %s22, 1
          %s1348 = scalar_select %p1347, %s22, 1
          %p1349 = scmp.lt.s32.totalorder %s23, 3
          %s1350 = scalar_select %p1349, %s23, 3
          %s1351 = smul.addr %s1348, 4
          %s1352 = sadd.s32 %s1350, %s1351
          %s1353 = smul.addr %s1352, 2
          %s1354 = scalar_lea.vmem %s4, %s1353
        $region86: #{unet_up_conv_block.2} parent=77 // pred_fallthru
          _
      $region78: #{unet_up_conv_block.2} parent=5 // pred_fallthru
        _
    $region6: #{unet_up_conv_block.2} parent=1 // loop_footer
      %s15 = sadd.s32 1, %s11
    $region7: #{unet_up_conv_block.2} parent=1 // loop_footer_branch
      %10 = sbr.rel target = $region3
    $region8: #{unet_up_conv_block.2} parent=1 // loop_exit
      _

</llo_original>
